<compile_context>
chip_gen: v6e
topology: v6e:2x2x1
jax: 0.10.0
libtpu: 0.0.40
codegen_flags: <defaults>
</compile_context>

<pallas_src>
import functools

import jax
import jax.numpy as jnp
from jax import lax
from jax.experimental import pallas as pl
from jax.experimental.pallas import tpu as pltpu

_NEG_INF = -1e30  # finite "minus infinity": avoids (-inf) - (-inf) NaNs


def _round_up(x, m):
    return (x + m - 1) // m * m


def _device_kind():
    try:
        return jax.devices()[0].device_kind.lower()
    except Exception:
        return ""


def _is_v7():
    kind = _device_kind()
    return ("v7" in kind) or ("tpu7" in kind)


def _physical_vmem_bytes():
    try:
        cap = getattr(pltpu.get_tpu_info(), "vmem_capacity_bytes", None)
        if cap:
            return int(cap)
    except Exception:
        pass
    return (64 if _is_v7() else 128) * 1024 * 1024


def prepare_cbow_params(w_emb, w_out, *, dtype=None, tile_v=512,
                        pad_d_to_multiple=None):
    """One-time parameter preparation (do at model init, not per forward call).

    Args:
      w_emb: [D, V]  `embeddings.weight`   (nn.Linear(vocab_size, embedding_dim))
      w_out: [V, D]  `output_layer.weight` (nn.Linear(embedding_dim, vocab_size))
      dtype: optional storage dtype for the weights (e.g. jnp.bfloat16).
      tile_v: vocab tile width (rounded to a multiple of 128 lanes).
      pad_d_to_multiple: optionally zero-pad the embedding dim (MXU width).

    Returns a dict with MXU-natural, padded weights and tiling metadata.
    """
    d, v = w_emb.shape
    assert w_out.shape == (v, d), (w_out.shape, (v, d))
    if dtype is not None:
        w_emb = w_emb.astype(dtype)
        w_out = w_out.astype(dtype)

    tile_v = max(128, _round_up(min(int(tile_v), _round_up(v, 128)), 128))
    v_pad = _round_up(v, tile_v)
    d_pad = d if pad_d_to_multiple is None else _round_up(d, int(pad_d_to_multiple))

    # MXU-natural layouts: both in-kernel matmuls become plain (M,K)x(K,N).
    w_emb_t = w_emb.T          # [V, D]  for hidden = x @ w_emb_t
    w_out_t = w_out.T          # [D, V]  for logits = hidden @ w_out_t
    if (v_pad, d_pad) != (v, d):
        w_emb_t = jnp.pad(w_emb_t, ((0, v_pad - v), (0, d_pad - d)))
        w_out_t = jnp.pad(w_out_t, ((0, d_pad - d), (0, v_pad - v)))

    return dict(w_emb_t=w_emb_t, w_out_t=w_out_t,
                vocab_size=v, embedding_dim=d, tile_v=tile_v)


def cbow_kernel(x_ref, w_emb_ref, w_out_ref, logits_ref, lse_ref,
                hid_acc, m_acc, l_acc, *,
                v_actual, v_pad, tile_v, exp_dtype, fuse_norm):
    p = pl.program_id(1)          # phase: 0 = hidden accumulation, 1 = logits
    v = pl.program_id(2)          # vocab tile index
    nv = pl.num_programs(2)

    @pl.when((p == 0) & (v == 0))
    def _init():
        hid_acc[...] = jnp.zeros_like(hid_acc)
        m_acc[...] = jnp.full_like(m_acc, _NEG_INF)
        l_acc[...] = jnp.zeros_like(l_acc)

    @pl.when(p == 0)
    def _accumulate_hidden():
        # hidden[b, d] += x[b, v_tile] @ w_emb_t[v_tile, d]  (plain MXU matmul)
        x = x_ref[...].astype(w_emb_ref.dtype)
        hid_acc[...] += jnp.dot(x, w_emb_ref[...],
                                preferred_element_type=jnp.float32)

    @pl.when(p == 1)
    def _logits_and_online_lse():
        hidden = hid_acc[...].astype(w_out_ref.dtype)
        logits = jnp.dot(hidden, w_out_ref[...],
                         preferred_element_type=jnp.float32)   # [tile_b, tile_v] f32

        if v_actual < v_pad:
            # Mask padded vocab columns out of the logsumexp.
            col = v * tile_v + lax.broadcasted_iota(jnp.int32, logits.shape, 1)
            masked = jnp.where(col < v_actual, logits, _NEG_INF)
        else:
            masked = logits

        m_prev = m_acc[...]
        m_new = jnp.maximum(m_prev, jnp.max(masked, axis=-1, keepdims=True))
        alpha = jnp.exp(m_prev - m_new)
        probs = jnp.exp((masked - m_new).astype(exp_dtype)).astype(jnp.float32)
        l_new = alpha * l_acc[...] + jnp.sum(probs, axis=-1, keepdims=True)
        m_acc[...] = m_new
        l_acc[...] = l_new

        if fuse_norm:
            # Whole vocab in one tile -> finalize log-probs in-kernel.
            logits_ref[...] = (logits - (m_new + jnp.log(l_new))).astype(logits_ref.dtype)
        else:
            # Write raw logits; the (tiny) lse output normalizes them outside.
            logits_ref[...] = logits.astype(logits_ref.dtype)

        @pl.when(v == nv - 1)
        def _write_lse():
            lse_ref[...] = m_acc[...] + jnp.log(l_acc[...])


def cbow_forward(x, params, *, tile_b=128, exp_in_bf16=None,
                 out_dtype=jnp.float32, interpret=False):
    """x: [B, vocab_size] dense context average; params from prepare_cbow_params."""
    w_emb_t = params["w_emb_t"]          # [V_pad, D_pad]
    w_out_t = params["w_out_t"]          # [D_pad, V_pad]
    V = params["vocab_size"]
    tile_v = params["tile_v"]
    v_pad, d_pad = w_emb_t.shape
    assert w_out_t.shape == (d_pad, v_pad)
    B, v_in = x.shape
    assert v_in == V, (v_in, V)
    nv = v_pad // tile_v

    kind = _device_kind()
    is_v5 = "v5" in kind
    n_tc = 2 if _is_v7() else 1

    # Batch tiling: no padding of tiny batches up to 128; on 2-TC parts make
    # sure the "parallel" axis has at least n_tc steps when possible.
    tile_b = max(8, _round_up(min(int(tile_b), _round_up(B, 8)), 8))
    if n_tc > 1 and pl.cdiv(B, tile_b) < n_tc and B > 8:
        tile_b = max(8, _round_up(pl.cdiv(B, n_tc), 8))
    b_pad = _round_up(B, tile_b)
    nb = b_pad // tile_b

    x_p = x
    if (b_pad, v_pad) != (B, V):
        x_p = jnp.pad(x, ((0, b_pad - B), (0, v_pad - V)))

    # exp dtype policy: bf16 EUP on v6e/v7x when weights are bf16; f32 on v5e.
    if exp_in_bf16 is None:
        exp_in_bf16 = (w_emb_t.dtype == jnp.bfloat16) and (not is_v5)
    exp_dtype = jnp.bfloat16 if exp_in_bf16 else jnp.float32

    fuse_norm = (nv == 1)   # whole (padded) vocab in one tile

    kernel = functools.partial(
        cbow_kernel, v_actual=V, v_pad=v_pad, tile_v=tile_v,
        exp_dtype=exp_dtype, fuse_norm=fuse_norm)

    # Index maps: each operand's DMA is confined to the phase that uses it
    # (repeated block indices are not re-fetched / re-written).
    def x_map(b, p, v):     return (b, v * (1 - p) + (nv - 1) * p)
    def wemb_map(b, p, v):  return (v * (1 - p) + (nv - 1) * p, 0)
    def wout_map(b, p, v):  return (0, v * p + (nv - 1) * (1 - p))
    def out_map(b, p, v):   return (b, v * p)
    def lse_map(b, p, v):   return (b, 0)

    # Generation-aware VMEM budget: 7/8 of physical capacity as the ceiling.
    x_bytes = jnp.dtype(x_p.dtype).itemsize
    w_bytes = jnp.dtype(w_emb_t.dtype).itemsize
    w_bufs = 1 if fuse_norm else 2
    est = (2 * tile_b * tile_v * x_bytes          # x tiles (double buffered)
           + w_bufs * tile_v * d_pad * w_bytes    # w_emb_t tiles
           + w_bufs * d_pad * tile_v * w_bytes    # w_out_t tiles
           + 2 * tile_b * tile_v * 4              # logits output tiles
           + tile_b * d_pad * 4                   # hidden accumulator scratch
           + 6 * tile_b * tile_v * 4)             # in-kernel temporaries headroom
    vmem_limit = int(min(max(2 * est, 32 * 1024 * 1024),
                         _physical_vmem_bytes() * 7 // 8))

    def run(single_buffer_weights):
        wmode = pl.Buffered(1) if single_buffer_weights else None
        return pl.pallas_call(
            kernel,
            out_shape=(jax.ShapeDtypeStruct((b_pad, v_pad), out_dtype),
                       jax.ShapeDtypeStruct((b_pad, 1), jnp.float32)),
            grid=(nb, 2, nv),
            in_specs=[
                pl.BlockSpec((tile_b, tile_v), x_map),
                pl.BlockSpec((tile_v, d_pad), wemb_map, pipeline_mode=wmode),
                pl.BlockSpec((d_pad, tile_v), wout_map, pipeline_mode=wmode),
            ],
            out_specs=(pl.BlockSpec((tile_b, tile_v), out_map),
                       pl.BlockSpec((tile_b, 1), lse_map)),
            scratch_shapes=[
                pltpu.VMEM((tile_b, d_pad), jnp.float32),   # hidden accumulator
                pltpu.VMEM((tile_b, 1), jnp.float32),       # running max
                pltpu.VMEM((tile_b, 1), jnp.float32),       # running sum-exp
            ],
            compiler_params=pltpu.CompilerParams(
                dimension_semantics=("parallel", "arbitrary", "arbitrary"),
                vmem_limit_bytes=vmem_limit),
            interpret=interpret,
        )(x_p, w_emb_t, w_out_t)

    if fuse_norm:
        # Constant weight index maps -> try single-buffered weights (halves
        # their VMEM footprint); fall back to default double buffering.
        try:
            logits, _ = run(True)
        except Exception:
            logits, _ = run(False)
        out = logits
    else:
        logits, lse = run(False)
        # One fused broadcast-subtract pass over the raw logits.
        out = (logits.astype(jnp.float32) - lse).astype(out_dtype)

    return out[:B, :V]


def cbow_reference(x, w_emb, w_out):
    hidden = x @ w_emb.T
    logits = hidden @ w_out.T
    return jax.nn.log_softmax(logits, axis=1)


if __name__ == "__main__":
    key = jax.random.PRNGKey(0)
    k1, k2, k3, k4, k5, k6 = jax.random.split(key, 6)

    # ---- Case 1: module-sized shapes (batch=8, vocab=256, embedding_dim=32).
    B, V, D = 8, 256, 32
    ctx_ids = jax.random.randint(k1, (B, 4), 0, V)
    x = jnp.mean(jax.nn.one_hot(ctx_ids, V, dtype=jnp.float32), axis=1)   # [B, V]
    w_emb = jax.random.normal(k2, (D, V), dtype=jnp.float32) * 0.02        # embeddings.weight
    w_out = jax.random.normal(k3, (V, D), dtype=jnp.float32) * 0.02        # output_layer.weight
    ref = cbow_reference(x, w_emb, w_out)

    # f32 weights; D padded once to the 128-wide MXU at init.
    params = prepare_cbow_params(w_emb, w_out, pad_d_to_multiple=128)
    out = jax.block_until_ready(cbow_forward(x, params))
    assert out.shape == (B, V)
    assert bool(jnp.allclose(out, ref, atol=1e-5, rtol=1e-5)), "f32 path mismatch"
    assert bool(jnp.allclose(jnp.sum(jnp.exp(out), axis=1), 1.0, atol=1e-4))

    # bf16 weights + bf16 x (one-hot averages are exact in bf16); bf16 exp on
    # v6e/v7x, f32 exp on v5e; f32 accumulation throughout.
    params_bf16 = prepare_cbow_params(w_emb, w_out, dtype=jnp.bfloat16,
                                      pad_d_to_multiple=128)
    out_bf16 = jax.block_until_ready(
        cbow_forward(x.astype(jnp.bfloat16), params_bf16))
    assert bool(jnp.allclose(out_bf16, ref, atol=2e-2, rtol=2e-2)), "bf16 path mismatch"
    assert bool(jnp.allclose(jnp.sum(jnp.exp(out_bf16), axis=1), 1.0, atol=2e-2))

    # ---- Case 2: exercise the vocab-tiled online-logsumexp path (nv > 1),
    # non-128-multiple vocab (masked pad columns) and a padded batch.
    B2, V2, D2 = 21, 1000, 48
    ctx2 = jax.random.randint(k4, (B2, 4), 0, V2)
    x2 = jnp.mean(jax.nn.one_hot(ctx2, V2, dtype=jnp.float32), axis=1)
    w_emb2 = jax.random.normal(k5, (D2, V2), dtype=jnp.float32) * 0.05
    w_out2 = jax.random.normal(k6, (V2, D2), dtype=jnp.float32) * 0.05
    ref2 = cbow_reference(x2, w_emb2, w_out2)

    params2 = prepare_cbow_params(w_emb2, w_out2, tile_v=256)
    out2 = jax.block_until_ready(cbow_forward(x2, params2))
    assert out2.shape == (B2, V2)
    assert bool(jnp.allclose(out2, ref2, atol=1e-4, rtol=1e-4)), "tiled-vocab path mismatch"
    assert bool(jnp.allclose(jnp.sum(jnp.exp(out2), axis=1), 1.0, atol=1e-4))

    print("KERNEL_OK")
</pallas_src>

<mosaic_0001>
module attributes {stable_mosaic.version = 11 : i64} {
  func.func @cbow_kernel(%arg0: i32, %arg1: i32, %arg2: i32, %arg3: memref<8x256xf32, #tpu.memory_space<vmem>>, %arg4: memref<256x128xf32, #tpu.memory_space<vmem>>, %arg5: memref<128x256xf32, #tpu.memory_space<vmem>>, %arg6: memref<8x256xf32, #tpu.memory_space<vmem>>, %arg7: memref<8x1xf32, #tpu.memory_space<vmem>>, %arg8: memref<8x128xf32, #tpu.memory_space<vmem>>, %arg9: memref<8x1xf32, #tpu.memory_space<vmem>>, %arg10: memref<8x1xf32, #tpu.memory_space<vmem>>) attributes {dimension_semantics = [#tpu.dimension_semantics<parallel>, #tpu.dimension_semantics<arbitrary>, #tpu.dimension_semantics<arbitrary>], iteration_bounds = array<i64: 1, 2, 1>, scalar_prefetch = 0 : i64, scratch_operands = 3 : i64, tpu.core_type = #tpu.core_type<tc>, window_params = [{transform_indices = @transform_0, window_bounds = array<i64: 8, 256>}, {pipeline_mode = #tpu.pipeline_mode<synchronous>, transform_indices = @transform_1, window_bounds = array<i64: 256, 128>}, {pipeline_mode = #tpu.pipeline_mode<synchronous>, transform_indices = @transform_2, window_bounds = array<i64: 128, 256>}, {transform_indices = @transform_3, window_bounds = array<i64: 8, 256>}, {transform_indices = @transform_4, window_bounds = array<i64: 8, 1>}]} {
    %c0_i32 = arith.constant 0 : i32
    %0 = arith.cmpi eq, %arg1, %c0_i32 : i32
    %c0_i32_0 = arith.constant 0 : i32
    %1 = arith.cmpi eq, %arg2, %c0_i32_0 : i32
    %2 = arith.andi %0, %1 : i1
    %3 = arith.extui %2 : i1 to i32
    %c0_i32_1 = arith.constant 0 : i32
    %4 = arith.cmpi ne, %3, %c0_i32_1 : i32
    scf.if %4 {
      %cst = arith.constant 0.000000e+00 : f32
      %11 = vector.broadcast %cst : f32 to vector<8x128xf32>
      %c0 = arith.constant 0 : index
      %c0_5 = arith.constant 0 : index
      %12 = vector.load %arg8[%c0, %c0_5] : memref<8x128xf32, #tpu.memory_space<vmem>>, vector<8x128xf32>
      tpu.vector_store %arg8[%c0, %c0_5], %11 {strides = array<i32>} : memref<8x128xf32, #tpu.memory_space<vmem>>, vector<8x128xf32>,
      %cst_6 = arith.constant -1.000000e+30 : f32
      %13 = vector.broadcast %cst_6 : f32 to vector<8x1xf32>
      %c0_7 = arith.constant 0 : index
      %c0_8 = arith.constant 0 : index
      %14 = vector.load %arg9[%c0_7, %c0_8] : memref<8x1xf32, #tpu.memory_space<vmem>>, vector<8x1xf32>
      tpu.vector_store %arg9[%c0_7, %c0_8], %13 {strides = array<i32>} : memref<8x1xf32, #tpu.memory_space<vmem>>, vector<8x1xf32>,
      %cst_9 = arith.constant 0.000000e+00 : f32
      %15 = vector.broadcast %cst_9 : f32 to vector<8x1xf32>
      %c0_10 = arith.constant 0 : index
      %c0_11 = arith.constant 0 : index
      %16 = vector.load %arg10[%c0_10, %c0_11] : memref<8x1xf32, #tpu.memory_space<vmem>>, vector<8x1xf32>
      tpu.vector_store %arg10[%c0_10, %c0_11], %15 {strides = array<i32>} : memref<8x1xf32, #tpu.memory_space<vmem>>, vector<8x1xf32>,
    } else {
    }
    %c0_i32_2 = arith.constant 0 : i32
    %5 = arith.cmpi eq, %arg1, %c0_i32_2 : i32
    %6 = arith.extui %5 : i1 to i32
    %c0_i32_3 = arith.constant 0 : i32
    %7 = arith.cmpi ne, %6, %c0_i32_3 : i32
    scf.if %7 {
      %c0 = arith.constant 0 : index
      %c0_5 = arith.constant 0 : index
      %11 = vector.load %arg3[%c0, %c0_5] : memref<8x256xf32, #tpu.memory_space<vmem>>, vector<8x256xf32>
      %c0_6 = arith.constant 0 : index
      %c0_7 = arith.constant 0 : index
      %12 = vector.load %arg8[%c0_6, %c0_7] : memref<8x128xf32, #tpu.memory_space<vmem>>, vector<8x128xf32>
      %c0_8 = arith.constant 0 : index
      %c0_9 = arith.constant 0 : index
      %13 = vector.load %arg4[%c0_8, %c0_9] : memref<256x128xf32, #tpu.memory_space<vmem>>, vector<256x128xf32>
      %cst = arith.constant dense<0.000000e+00> : vector<8x128xf32>
      %14 = tpu.matmul %11, %13, %cst {dimension_numbers = #tpu.dot_dimension_numbers<[1], [0], [0], [1], [0, 0, 1, 1], [], []>} : vector<8x256xf32>, vector<256x128xf32>, vector<8x128xf32> -> vector<8x128xf32>
      %15 = arith.addf %12, %14 : vector<8x128xf32>
      %c0_10 = arith.constant 0 : index
      %c0_11 = arith.constant 0 : index
      %16 = vector.load %arg8[%c0_10, %c0_11] : memref<8x128xf32, #tpu.memory_space<vmem>>, vector<8x128xf32>
      tpu.vector_store %arg8[%c0_10, %c0_11], %15 {strides = array<i32>} : memref<8x128xf32, #tpu.memory_space<vmem>>, vector<8x128xf32>,
    } else {
    }
    %c1_i32 = arith.constant 1 : i32
    %8 = arith.cmpi eq, %arg1, %c1_i32 : i32
    %9 = arith.extui %8 : i1 to i32
    %c0_i32_4 = arith.constant 0 : i32
    %10 = arith.cmpi ne, %9, %c0_i32_4 : i32
    scf.if %10 {
      %c0 = arith.constant 0 : index
      %c0_5 = arith.constant 0 : index
      %11 = vector.load %arg8[%c0, %c0_5] : memref<8x128xf32, #tpu.memory_space<vmem>>, vector<8x128xf32>
      %c0_6 = arith.constant 0 : index
      %c0_7 = arith.constant 0 : index
      %12 = vector.load %arg5[%c0_6, %c0_7] : memref<128x256xf32, #tpu.memory_space<vmem>>, vector<128x256xf32>
      %cst = arith.constant dense<0.000000e+00> : vector<8x256xf32>
      %13 = tpu.matmul %11, %12, %cst {dimension_numbers = #tpu.dot_dimension_numbers<[1], [0], [0], [1], [0, 0, 1, 1], [], []>} : vector<8x128xf32>, vector<128x256xf32>, vector<8x256xf32> -> vector<8x256xf32>
      %c0_8 = arith.constant 0 : index
      %c0_9 = arith.constant 0 : index
      %14 = vector.load %arg9[%c0_8, %c0_9] : memref<8x1xf32, #tpu.memory_space<vmem>>, vector<8x1xf32>
      %cst_10 = arith.constant dense<0xFF800000> : vector<8xf32>
      %15 = vector.multi_reduction <maximumf>, %13, %cst_10 [1] : vector<8x256xf32> to vector<8xf32>
      %16 = vector.shape_cast %15 : vector<8xf32> to vector<8x1xf32>
      %17 = arith.maximumf %14, %16 : vector<8x1xf32>
      %18 = arith.subf %14, %17 : vector<8x1xf32>
      %19 = math.exp %18 : vector<8x1xf32>
      %20 = vector.broadcast %17 : vector<8x1xf32> to vector<8x256xf32>
      %21 = arith.subf %13, %20 : vector<8x256xf32>
      %22 = math.exp %21 : vector<8x256xf32>
      %c0_11 = arith.constant 0 : index
      %c0_12 = arith.constant 0 : index
      %23 = vector.load %arg10[%c0_11, %c0_12] : memref<8x1xf32, #tpu.memory_space<vmem>>, vector<8x1xf32>
      %24 = arith.mulf %19, %23 : vector<8x1xf32>
      %cst_13 = arith.constant dense<0.000000e+00> : vector<8xf32>
      %25 = vector.multi_reduction <add>, %22, %cst_13 [1] : vector<8x256xf32> to vector<8xf32>
      %26 = vector.shape_cast %25 : vector<8xf32> to vector<8x1xf32>
      %27 = arith.addf %24, %26 : vector<8x1xf32>
      %c0_14 = arith.constant 0 : index
      %c0_15 = arith.constant 0 : index
      %28 = vector.load %arg9[%c0_14, %c0_15] : memref<8x1xf32, #tpu.memory_space<vmem>>, vector<8x1xf32>
      tpu.vector_store %arg9[%c0_14, %c0_15], %17 {strides = array<i32>} : memref<8x1xf32, #tpu.memory_space<vmem>>, vector<8x1xf32>,
      %c0_16 = arith.constant 0 : index
      %c0_17 = arith.constant 0 : index
      %29 = vector.load %arg10[%c0_16, %c0_17] : memref<8x1xf32, #tpu.memory_space<vmem>>, vector<8x1xf32>
      tpu.vector_store %arg10[%c0_16, %c0_17], %27 {strides = array<i32>} : memref<8x1xf32, #tpu.memory_space<vmem>>, vector<8x1xf32>,
      %30 = math.log %27 : vector<8x1xf32>
      %31 = arith.addf %17, %30 : vector<8x1xf32>
      %32 = vector.broadcast %31 : vector<8x1xf32> to vector<8x256xf32>
      %33 = arith.subf %13, %32 : vector<8x256xf32>
      %c0_18 = arith.constant 0 : index
      %c0_19 = arith.constant 0 : index
      %34 = vector.load %arg6[%c0_18, %c0_19] : memref<8x256xf32, #tpu.memory_space<vmem>>, vector<8x256xf32>
      tpu.vector_store %arg6[%c0_18, %c0_19], %33 {strides = array<i32>} : memref<8x256xf32, #tpu.memory_space<vmem>>, vector<8x256xf32>,
      %c0_i32_20 = arith.constant 0 : i32
      %35 = arith.cmpi eq, %arg2, %c0_i32_20 : i32
      %36 = arith.extui %35 : i1 to i32
      %c0_i32_21 = arith.constant 0 : i32
      %37 = arith.cmpi ne, %36, %c0_i32_21 : i32
      scf.if %37 {
        %c0_22 = arith.constant 0 : index
        %c0_23 = arith.constant 0 : index
        %38 = vector.load %arg9[%c0_22, %c0_23] : memref<8x1xf32, #tpu.memory_space<vmem>>, vector<8x1xf32>
        %c0_24 = arith.constant 0 : index
        %c0_25 = arith.constant 0 : index
        %39 = vector.load %arg10[%c0_24, %c0_25] : memref<8x1xf32, #tpu.memory_space<vmem>>, vector<8x1xf32>
        %40 = math.log %39 : vector<8x1xf32>
        %41 = arith.addf %38, %40 : vector<8x1xf32>
        %c0_26 = arith.constant 0 : index
        %c0_27 = arith.constant 0 : index
        %42 = vector.load %arg7[%c0_26, %c0_27] : memref<8x1xf32, #tpu.memory_space<vmem>>, vector<8x1xf32>
        tpu.vector_store %arg7[%c0_26, %c0_27], %41 {strides = array<i32>} : memref<8x1xf32, #tpu.memory_space<vmem>>, vector<8x1xf32>,
      } else {
      }
    } else {
    }
    return
  }
  func.func @transform_0(%arg0: i32, %arg1: i32, %arg2: i32) -> (i32, i32) {
    %c1_i32 = arith.constant 1 : i32
    %0 = arith.subi %c1_i32, %arg1 : i32
    %1 = arith.muli %arg2, %0 : i32
    %c0_i32 = arith.constant 0 : i32
    %2 = arith.muli %c0_i32, %arg1 : i32
    %3 = arith.addi %1, %2 : i32
    %c0_i32_0 = arith.constant 0 : i32
    return %arg0, %3 : i32, i32
  }
  func.func @transform_1(%arg0: i32, %arg1: i32, %arg2: i32) -> (i32, i32) {
    %c1_i32 = arith.constant 1 : i32
    %0 = arith.subi %c1_i32, %arg1 : i32
    %1 = arith.muli %arg2, %0 : i32
    %c0_i32 = arith.constant 0 : i32
    %2 = arith.muli %c0_i32, %arg1 : i32
    %3 = arith.addi %1, %2 : i32
    %c0_i32_0 = arith.constant 0 : i32
    %c0_i32_1 = arith.constant 0 : i32
    return %3, %c0_i32_0 : i32, i32
  }
  func.func @transform_2(%arg0: i32, %arg1: i32, %arg2: i32) -> (i32, i32) {
    %0 = arith.muli %arg2, %arg1 : i32
    %c1_i32 = arith.constant 1 : i32
    %1 = arith.subi %c1_i32, %arg1 : i32
    %c0_i32 = arith.constant 0 : i32
    %2 = arith.muli %c0_i32, %1 : i32
    %3 = arith.addi %0, %2 : i32
    %c0_i32_0 = arith.constant 0 : i32
    %c0_i32_1 = arith.constant 0 : i32
    return %c0_i32_0, %3 : i32, i32
  }
  func.func @transform_3(%arg0: i32, %arg1: i32, %arg2: i32) -> (i32, i32) {
    %0 = arith.muli %arg2, %arg1 : i32
    %c0_i32 = arith.constant 0 : i32
    return %arg0, %0 : i32, i32
  }
  func.func @transform_4(%arg0: i32, %arg1: i32, %arg2: i32) -> (i32, i32) {
    %c0_i32 = arith.constant 0 : i32
    %c0_i32_0 = arith.constant 0 : i32
    return %arg0, %c0_i32 : i32, i32
  }
}

module attributes {stable_mosaic.version = 11 : i64} {
  func.func @cbow_kernel(%arg0: i32, %arg1: i32, %arg2: i32, %arg3: memref<8x256xf32, #tpu.memory_space<vmem>>, %arg4: memref<256x128xf32, #tpu.memory_space<vmem>>, %arg5: memref<128x256xf32, #tpu.memory_space<vmem>>, %arg6: memref<8x256xf32, #tpu.memory_space<vmem>>, %arg7: memref<8x1xf32, #tpu.memory_space<vmem>>, %arg8: memref<8x128xf32, #tpu.memory_space<vmem>>, %arg9: memref<8x1xf32, #tpu.memory_space<vmem>>, %arg10: memref<8x1xf32, #tpu.memory_space<vmem>>) attributes {dimension_semantics = [#tpu.dimension_semantics<parallel>, #tpu.dimension_semantics<arbitrary>, #tpu.dimension_semantics<arbitrary>], iteration_bounds = array<i64: 1, 2, 1>, scalar_prefetch = 0 : i64, scratch_operands = 3 : i64, tpu.core_type = #tpu.core_type<tc>, window_params = [{transform_indices = @transform_0, window_bounds = array<i64: 8, 256>}, {transform_indices = @transform_1, window_bounds = array<i64: 256, 128>}, {transform_indices = @transform_2, window_bounds = array<i64: 128, 256>}, {transform_indices = @transform_3, window_bounds = array<i64: 8, 256>}, {transform_indices = @transform_4, window_bounds = array<i64: 8, 1>}]} {
    %c0_i32 = arith.constant 0 : i32
    %0 = arith.cmpi eq, %arg1, %c0_i32 : i32
    %c0_i32_0 = arith.constant 0 : i32
    %1 = arith.cmpi eq, %arg2, %c0_i32_0 : i32
    %2 = arith.andi %0, %1 : i1
    %3 = arith.extui %2 : i1 to i32
    %c0_i32_1 = arith.constant 0 : i32
    %4 = arith.cmpi ne, %3, %c0_i32_1 : i32
    scf.if %4 {
      %cst = arith.constant 0.000000e+00 : f32
      %11 = vector.broadcast %cst : f32 to vector<8x128xf32>
      %c0 = arith.constant 0 : index
      %c0_5 = arith.constant 0 : index
      %12 = vector.load %arg8[%c0, %c0_5] : memref<8x128xf32, #tpu.memory_space<vmem>>, vector<8x128xf32>
      tpu.vector_store %arg8[%c0, %c0_5], %11 {strides = array<i32>} : memref<8x128xf32, #tpu.memory_space<vmem>>, vector<8x128xf32>,
      %cst_6 = arith.constant -1.000000e+30 : f32
      %13 = vector.broadcast %cst_6 : f32 to vector<8x1xf32>
      %c0_7 = arith.constant 0 : index
      %c0_8 = arith.constant 0 : index
      %14 = vector.load %arg9[%c0_7, %c0_8] : memref<8x1xf32, #tpu.memory_space<vmem>>, vector<8x1xf32>
      tpu.vector_store %arg9[%c0_7, %c0_8], %13 {strides = array<i32>} : memref<8x1xf32, #tpu.memory_space<vmem>>, vector<8x1xf32>,
      %cst_9 = arith.constant 0.000000e+00 : f32
      %15 = vector.broadcast %cst_9 : f32 to vector<8x1xf32>
      %c0_10 = arith.constant 0 : index
      %c0_11 = arith.constant 0 : index
      %16 = vector.load %arg10[%c0_10, %c0_11] : memref<8x1xf32, #tpu.memory_space<vmem>>, vector<8x1xf32>
      tpu.vector_store %arg10[%c0_10, %c0_11], %15 {strides = array<i32>} : memref<8x1xf32, #tpu.memory_space<vmem>>, vector<8x1xf32>,
    } else {
    }
    %c0_i32_2 = arith.constant 0 : i32
    %5 = arith.cmpi eq, %arg1, %c0_i32_2 : i32
    %6 = arith.extui %5 : i1 to i32
    %c0_i32_3 = arith.constant 0 : i32
    %7 = arith.cmpi ne, %6, %c0_i32_3 : i32
    scf.if %7 {
      %c0 = arith.constant 0 : index
      %c0_5 = arith.constant 0 : index
      %11 = vector.load %arg3[%c0, %c0_5] : memref<8x256xf32, #tpu.memory_space<vmem>>, vector<8x256xf32>
      %c0_6 = arith.constant 0 : index
      %c0_7 = arith.constant 0 : index
      %12 = vector.load %arg8[%c0_6, %c0_7] : memref<8x128xf32, #tpu.memory_space<vmem>>, vector<8x128xf32>
      %c0_8 = arith.constant 0 : index
      %c0_9 = arith.constant 0 : index
      %13 = vector.load %arg4[%c0_8, %c0_9] : memref<256x128xf32, #tpu.memory_space<vmem>>, vector<256x128xf32>
      %cst = arith.constant dense<0.000000e+00> : vector<8x128xf32>
      %14 = tpu.matmul %11, %13, %cst {dimension_numbers = #tpu.dot_dimension_numbers<[1], [0], [0], [1], [0, 0, 1, 1], [], []>} : vector<8x256xf32>, vector<256x128xf32>, vector<8x128xf32> -> vector<8x128xf32>
      %15 = arith.addf %12, %14 : vector<8x128xf32>
      %c0_10 = arith.constant 0 : index
      %c0_11 = arith.constant 0 : index
      %16 = vector.load %arg8[%c0_10, %c0_11] : memref<8x128xf32, #tpu.memory_space<vmem>>, vector<8x128xf32>
      tpu.vector_store %arg8[%c0_10, %c0_11], %15 {strides = array<i32>} : memref<8x128xf32, #tpu.memory_space<vmem>>, vector<8x128xf32>,
    } else {
    }
    %c1_i32 = arith.constant 1 : i32
    %8 = arith.cmpi eq, %arg1, %c1_i32 : i32
    %9 = arith.extui %8 : i1 to i32
    %c0_i32_4 = arith.constant 0 : i32
    %10 = arith.cmpi ne, %9, %c0_i32_4 : i32
    scf.if %10 {
      %c0 = arith.constant 0 : index
      %c0_5 = arith.constant 0 : index
      %11 = vector.load %arg8[%c0, %c0_5] : memref<8x128xf32, #tpu.memory_space<vmem>>, vector<8x128xf32>
      %c0_6 = arith.constant 0 : index
      %c0_7 = arith.constant 0 : index
      %12 = vector.load %arg5[%c0_6, %c0_7] : memref<128x256xf32, #tpu.memory_space<vmem>>, vector<128x256xf32>
      %cst = arith.constant dense<0.000000e+00> : vector<8x256xf32>
      %13 = tpu.matmul %11, %12, %cst {dimension_numbers = #tpu.dot_dimension_numbers<[1], [0], [0], [1], [0, 0, 1, 1], [], []>} : vector<8x128xf32>, vector<128x256xf32>, vector<8x256xf32> -> vector<8x256xf32>
      %c0_8 = arith.constant 0 : index
      %c0_9 = arith.constant 0 : index
      %14 = vector.load %arg9[%c0_8, %c0_9] : memref<8x1xf32, #tpu.memory_space<vmem>>, vector<8x1xf32>
      %cst_10 = arith.constant dense<0xFF800000> : vector<8xf32>
      %15 = vector.multi_reduction <maximumf>, %13, %cst_10 [1] : vector<8x256xf32> to vector<8xf32>
      %16 = vector.shape_cast %15 : vector<8xf32> to vector<8x1xf32>
      %17 = arith.maximumf %14, %16 : vector<8x1xf32>
      %18 = arith.subf %14, %17 : vector<8x1xf32>
      %19 = math.exp %18 : vector<8x1xf32>
      %20 = vector.broadcast %17 : vector<8x1xf32> to vector<8x256xf32>
      %21 = arith.subf %13, %20 : vector<8x256xf32>
      %22 = math.exp %21 : vector<8x256xf32>
      %c0_11 = arith.constant 0 : index
      %c0_12 = arith.constant 0 : index
      %23 = vector.load %arg10[%c0_11, %c0_12] : memref<8x1xf32, #tpu.memory_space<vmem>>, vector<8x1xf32>
      %24 = arith.mulf %19, %23 : vector<8x1xf32>
      %cst_13 = arith.constant dense<0.000000e+00> : vector<8xf32>
      %25 = vector.multi_reduction <add>, %22, %cst_13 [1] : vector<8x256xf32> to vector<8xf32>
      %26 = vector.shape_cast %25 : vector<8xf32> to vector<8x1xf32>
      %27 = arith.addf %24, %26 : vector<8x1xf32>
      %c0_14 = arith.constant 0 : index
      %c0_15 = arith.constant 0 : index
      %28 = vector.load %arg9[%c0_14, %c0_15] : memref<8x1xf32, #tpu.memory_space<vmem>>, vector<8x1xf32>
      tpu.vector_store %arg9[%c0_14, %c0_15], %17 {strides = array<i32>} : memref<8x1xf32, #tpu.memory_space<vmem>>, vector<8x1xf32>,
      %c0_16 = arith.constant 0 : index
      %c0_17 = arith.constant 0 : index
      %29 = vector.load %arg10[%c0_16, %c0_17] : memref<8x1xf32, #tpu.memory_space<vmem>>, vector<8x1xf32>
      tpu.vector_store %arg10[%c0_16, %c0_17], %27 {strides = array<i32>} : memref<8x1xf32, #tpu.memory_space<vmem>>, vector<8x1xf32>,
      %30 = math.log %27 : vector<8x1xf32>
      %31 = arith.addf %17, %30 : vector<8x1xf32>
      %32 = vector.broadcast %31 : vector<8x1xf32> to vector<8x256xf32>
      %33 = arith.subf %13, %32 : vector<8x256xf32>
      %c0_18 = arith.constant 0 : index
      %c0_19 = arith.constant 0 : index
      %34 = vector.load %arg6[%c0_18, %c0_19] : memref<8x256xf32, #tpu.memory_space<vmem>>, vector<8x256xf32>
      tpu.vector_store %arg6[%c0_18, %c0_19], %33 {strides = array<i32>} : memref<8x256xf32, #tpu.memory_space<vmem>>, vector<8x256xf32>,
      %c0_i32_20 = arith.constant 0 : i32
      %35 = arith.cmpi eq, %arg2, %c0_i32_20 : i32
      %36 = arith.extui %35 : i1 to i32
      %c0_i32_21 = arith.constant 0 : i32
      %37 = arith.cmpi ne, %36, %c0_i32_21 : i32
      scf.if %37 {
        %c0_22 = arith.constant 0 : index
        %c0_23 = arith.constant 0 : index
        %38 = vector.load %arg9[%c0_22, %c0_23] : memref<8x1xf32, #tpu.memory_space<vmem>>, vector<8x1xf32>
        %c0_24 = arith.constant 0 : index
        %c0_25 = arith.constant 0 : index
        %39 = vector.load %arg10[%c0_24, %c0_25] : memref<8x1xf32, #tpu.memory_space<vmem>>, vector<8x1xf32>
        %40 = math.log %39 : vector<8x1xf32>
        %41 = arith.addf %38, %40 : vector<8x1xf32>
        %c0_26 = arith.constant 0 : index
        %c0_27 = arith.constant 0 : index
        %42 = vector.load %arg7[%c0_26, %c0_27] : memref<8x1xf32, #tpu.memory_space<vmem>>, vector<8x1xf32>
        tpu.vector_store %arg7[%c0_26, %c0_27], %41 {strides = array<i32>} : memref<8x1xf32, #tpu.memory_space<vmem>>, vector<8x1xf32>,
      } else {
      }
    } else {
    }
    return
  }
  func.func @transform_0(%arg0: i32, %arg1: i32, %arg2: i32) -> (i32, i32) {
    %c1_i32 = arith.constant 1 : i32
    %0 = arith.subi %c1_i32, %arg1 : i32
    %1 = arith.muli %arg2, %0 : i32
    %c0_i32 = arith.constant 0 : i32
    %2 = arith.muli %c0_i32, %arg1 : i32
    %3 = arith.addi %1, %2 : i32
    %c0_i32_0 = arith.constant 0 : i32
    return %arg0, %3 : i32, i32
  }
  func.func @transform_1(%arg0: i32, %arg1: i32, %arg2: i32) -> (i32, i32) {
    %c1_i32 = arith.constant 1 : i32
    %0 = arith.subi %c1_i32, %arg1 : i32
    %1 = arith.muli %arg2, %0 : i32
    %c0_i32 = arith.constant 0 : i32
    %2 = arith.muli %c0_i32, %arg1 : i32
    %3 = arith.addi %1, %2 : i32
    %c0_i32_0 = arith.constant 0 : i32
    %c0_i32_1 = arith.constant 0 : i32
    return %3, %c0_i32_0 : i32, i32
  }
  func.func @transform_2(%arg0: i32, %arg1: i32, %arg2: i32) -> (i32, i32) {
    %0 = arith.muli %arg2, %arg1 : i32
    %c1_i32 = arith.constant 1 : i32
    %1 = arith.subi %c1_i32, %arg1 : i32
    %c0_i32 = arith.constant 0 : i32
    %2 = arith.muli %c0_i32, %1 : i32
    %3 = arith.addi %0, %2 : i32
    %c0_i32_0 = arith.constant 0 : i32
    %c0_i32_1 = arith.constant 0 : i32
    return %c0_i32_0, %3 : i32, i32
  }
  func.func @transform_3(%arg0: i32, %arg1: i32, %arg2: i32) -> (i32, i32) {
    %0 = arith.muli %arg2, %arg1 : i32
    %c0_i32 = arith.constant 0 : i32
    return %arg0, %0 : i32, i32
  }
  func.func @transform_4(%arg0: i32, %arg1: i32, %arg2: i32) -> (i32, i32) {
    %c0_i32 = arith.constant 0 : i32
    %c0_i32_0 = arith.constant 0 : i32
    return %arg0, %c0_i32 : i32, i32
  }
}

</mosaic_0001>

<llo_original>
// kernel: tpu_custom_call.1
$region0: #{tpu_custom_call.1}
  #allocation0 [shape = 'u32[]', space=smem, size = 0x4, offset = 0x4, fixed_abs, tag = 'smem constant byte address 0x4 - core index']
  #allocation1 [shape = 'u32[144,128]{1,0:T(1,128)}', space=vmem, size = 0x12000, scoped, tag = 'internal scratch']
  #allocation2 [shape = 'f32[8,128]{1,0:T(8,128)}', space=vmem, size = 0x1000, scoped, tag = 'scratch operand']
  #allocation3 [shape = 'f32[8,1]{1,0:T(8,128)}', space=vmem, size = 0x1000, scoped, tag = 'scratch operand']
  #allocation4 [shape = 'f32[8,1]{1,0:T(8,128)}', space=vmem, size = 0x1000, scoped, tag = 'scratch operand']
  %s0 = inlined_call_operand.hbm [shape: f32[8,256], index: 0, kind: input, shape index: {}]
  %s1 = inlined_call_operand.hbm [shape: f32[256,128], index: 1, kind: input, shape index: {}]
  %s2 = inlined_call_operand.hbm [shape: f32[128,256], index: 2, kind: input, shape index: {}]
  %s3 = inlined_call_operand.hbm [shape: f32[8,256], index: 3, kind: output, shape index: {0}]
  %s4 = inlined_call_operand.vmem [shape: f32[8,1], index: 4, kind: output, shape index: {1}]
  %5 = xla_tuple %s3, %s4
  %s6 = sld [smem:[#allocation0]]
  $region81: #{tpu_custom_call.1} parent=0
    _
  %s8 = ssub.s32 1, %s6
  %s9 = scalar_select 0, %s8, %s6
  $region1: #{tpu_custom_call.1} parent=0
    #allocation5 [shape = 'u8[16384]{0}', space=vmem, size = 0x4000, scoped, tag = 'input window, operand 0']
    #allocation6 [shape = 's32[2]{0}', space=sflag, size = 0x8, scoped, tag = 'scoped memory for tpu_custom_call.1']
    #allocation7 [shape = 's32[2]{0}', space=sflag, size = 0x8, scoped, tag = 'scoped memory for tpu_custom_call.1']
    #allocation8 [shape = 'u8[131072]{0}', space=vmem, size = 0x20000, scoped, tag = 'input window, operand 1, single buffered']
    #allocation9 [shape = 's32[1]{0}', space=sflag, size = 0x4, scoped, tag = 'scoped memory for tpu_custom_call.1']
    #allocation10 [shape = 'u8[131072]{0}', space=vmem, size = 0x20000, scoped, tag = 'input window, operand 2, single buffered']
    #allocation11 [shape = 'u8[16384]{0}', space=vmem, size = 0x4000, scoped, tag = 'output window, operand 0']
    %10 = vsyncpa [#allocation6], 0
    %s11 = scalar_lea.sflag [#allocation6], 1
    %12 = vsyncpa %s11, 0
    %13 = vsyncpa [#allocation9], 0
    %14 = vsyncpa [#allocation7], 0
    %s15 = scalar_lea.sflag [#allocation7], 1
    %16 = vsyncpa %s15, 0
    loop: start=0, step=1, limit=4
    $region2: #{tpu_custom_call.1} parent=1 // loop_pre_header
      _
    $region3: #{tpu_custom_call.1} parent=1 // loop_header
      %s18 = sphi 0, %s22
      %p19 = scmp.ge.s32.totalorder %s18, 4
      %s25 = sphi 0, %s44
      %s26 = sphi 0, %s40
      %s27 = sphi 0, %s36
      %s28 = sphi 0, %s25
      %s29 = sphi 0, %s26
      %s30 = sphi 0, %s27
      %s31 = sphi 0, %s28
      %s32 = sphi 0, %s29
      %s33 = sphi 0, %s30
      %s53 = sphi 0, %s55
      %s56 = sphi 0, %s53
      %s57 = sphi 0, %s56
      %s73 = sphi 0, %s57
      %s83 = sphi 0, %s85
      %s86 = sphi 0, %s83
      %s87 = sphi 0, %s86
      %s103 = sphi 0, %s87
      %s111 = sphi 0, %s113
      %s114 = sphi 0, %s111
      %s115 = sphi 0, %s114
      %s131 = sphi 0, %s115
      %s141 = sphi 0, %s143
      %s144 = sphi 0, %s141
      %s145 = sphi 0, %s144
      %s161 = sphi 0, %s145
      %s167 = sphi 0, %s169
      %s170 = sphi 0, %s167
      %s171 = sphi 0, %s170
      %s187 = sphi 0, %s171
    $region4: #{tpu_custom_call.1} parent=1 // loop_header_branch
      %21 = sbr.rel (%p19) target = $region8
    $region5: #{tpu_custom_call.1} parent=1 // loop_body
      %s23 = ssub.s32 %s18, 1
      %s24 = ssub.s32 %s18, 2
      %s34 = sadd.s32 1, %s27
      %p35 = scmp.ge.s32.totalorder %s34, 1
      %s36 = scalar_select %p35, 0, %s34
      %s37 = sadd.s32 1, %s26
      %s38 = scalar_select %p35, %s37, %s26
      %p39 = scmp.ge.s32.totalorder %s38, 2
      %s40 = scalar_select %p39, 0, %s38
      %s41 = sadd.s32 1, %s25
      %s42 = scalar_select %p39, %s41, %s25
      %p43 = scmp.ge.s32.totalorder %s42, 1
      %s44 = scalar_select %p43, 0, %s42
      %s45 = ssub.s32 1, %s26
      %s46 = smul.u32 %s27, %s45
      %s47 = ssub.s32 1, %s40
      %s48 = smul.u32 %s36, %s47
      %s49 = ssub.s32 %s25, %s44
      %s50 = ssub.s32 %s46, %s48
      %s51 = sor.u32 %s49, %s50
      %p52 = scmp.eq.s32.totalorder %s51, 0
      %s54 = sadd.s32 %s53, 1
      %s55 = scalar_select %p52, %s53, %s54
      %p58 = pneg %p52
      %p59 = scmp.eq.s32.totalorder %s18, 1
      %p60 = por %p58, %p59
      %p61 = scmp.ne.s32.totalorder %s53, %s56
      %p62 = scmp.eq.s32.totalorder %s18, 0
      %p63 = por %p61, %p62
      %p64 = scmp.ne.s32.totalorder %s53, %s56
      %p65 = scmp.eq.s32.totalorder %s23, 1
      %p66 = por %p64, %p65
      %p67 = scmp.ne.s32.totalorder %s56, %s57
      %p68 = scmp.eq.s32.totalorder %s23, 0
      %p69 = por %p67, %p68
      %p70 = scmp.ne.s32.totalorder %s56, %s57
      %p71 = scmp.eq.s32.totalorder %s24, 1
      %p72 = por %p70, %p71
      %p74 = scmp.ne.s32.totalorder %s57, %s73
      %p75 = scmp.eq.s32.totalorder %s24, 0
      %p76 = por %p74, %p75
      %s77 = ssub.s32 1, %s26
      %s78 = smul.u32 %s27, %s77
      %s79 = ssub.s32 1, %s40
      %s80 = smul.u32 %s36, %s79
      %s81 = ssub.s32 %s78, %s80
      %p82 = scmp.eq.s32.totalorder %s81, 0
      %s84 = sadd.s32 %s83, 1
      %s85 = scalar_select %p82, %s83, %s84
      %p88 = pneg %p82
      %p89 = scmp.eq.s32.totalorder %s18, 1
      %p90 = por %p88, %p89
      %p91 = scmp.ne.s32.totalorder %s83, %s86
      %p92 = scmp.eq.s32.totalorder %s18, 0
      %p93 = por %p91, %p92
      %p94 = scmp.ne.s32.totalorder %s83, %s86
      %p95 = scmp.eq.s32.totalorder %s23, 1
      %p96 = por %p94, %p95
      %p97 = scmp.ne.s32.totalorder %s86, %s87
      %p98 = scmp.eq.s32.totalorder %s23, 0
      %p99 = por %p97, %p98
      %p100 = scmp.ne.s32.totalorder %s86, %s87
      %p101 = scmp.eq.s32.totalorder %s24, 1
      %p102 = por %p100, %p101
      %p104 = scmp.ne.s32.totalorder %s87, %s103
      %p105 = scmp.eq.s32.totalorder %s24, 0
      %p106 = por %p104, %p105
      %s107 = smul.u32 %s27, %s26
      %s108 = smul.u32 %s36, %s40
      %s109 = ssub.s32 %s107, %s108
      %p110 = scmp.eq.s32.totalorder %s109, 0
      %s112 = sadd.s32 %s111, 1
      %s113 = scalar_select %p110, %s111, %s112
      %p116 = pneg %p110
      %p117 = scmp.eq.s32.totalorder %s18, 1
      %p118 = por %p116, %p117
      %p119 = scmp.ne.s32.totalorder %s111, %s114
      %p120 = scmp.eq.s32.totalorder %s18, 0
      %p121 = por %p119, %p120
      %p122 = scmp.ne.s32.totalorder %s111, %s114
      %p123 = scmp.eq.s32.totalorder %s23, 1
      %p124 = por %p122, %p123
      %p125 = scmp.ne.s32.totalorder %s114, %s115
      %p126 = scmp.eq.s32.totalorder %s23, 0
      %p127 = por %p125, %p126
      %p128 = scmp.ne.s32.totalorder %s114, %s115
      %p129 = scmp.eq.s32.totalorder %s24, 1
      %p130 = por %p128, %p129
      %p132 = scmp.ne.s32.totalorder %s115, %s131
      %p133 = scmp.eq.s32.totalorder %s24, 0
      %p134 = por %p132, %p133
      %s135 = smul.u32 %s27, %s26
      %s136 = smul.u32 %s36, %s40
      %s137 = ssub.s32 %s25, %s44
      %s138 = ssub.s32 %s135, %s136
      %s139 = sor.u32 %s137, %s138
      %p140 = scmp.eq.s32.totalorder %s139, 0
      %s142 = sadd.s32 %s141, 1
      %s143 = scalar_select %p140, %s141, %s142
      %p146 = pneg %p140
      %p147 = scmp.eq.s32.totalorder %s18, 1
      %p148 = por %p146, %p147
      %p149 = scmp.ne.s32.totalorder %s141, %s144
      %p150 = scmp.eq.s32.totalorder %s18, 0
      %p151 = por %p149, %p150
      %p152 = scmp.ne.s32.totalorder %s141, %s144
      %p153 = scmp.eq.s32.totalorder %s23, 1
      %p154 = por %p152, %p153
      %p155 = scmp.ne.s32.totalorder %s144, %s145
      %p156 = scmp.eq.s32.totalorder %s23, 0
      %p157 = por %p155, %p156
      %p158 = scmp.ne.s32.totalorder %s144, %s145
      %p159 = scmp.eq.s32.totalorder %s24, 1
      %p160 = por %p158, %p159
      %p162 = scmp.ne.s32.totalorder %s145, %s161
      %p163 = scmp.eq.s32.totalorder %s24, 0
      %p164 = por %p162, %p163
      %s165 = ssub.s32 %s25, %s44
      %p166 = scmp.eq.s32.totalorder %s165, 0
      %s168 = sadd.s32 %s167, 1
      %s169 = scalar_select %p166, %s167, %s168
      %p172 = pneg %p166
      %p173 = scmp.eq.s32.totalorder %s18, 1
      %p174 = por %p172, %p173
      %p175 = scmp.ne.s32.totalorder %s167, %s170
      %p176 = scmp.eq.s32.totalorder %s18, 0
      %p177 = por %p175, %p176
      %p178 = scmp.ne.s32.totalorder %s167, %s170
      %p179 = scmp.eq.s32.totalorder %s23, 1
      %p180 = por %p178, %p179
      %p181 = scmp.ne.s32.totalorder %s170, %s171
      %p182 = scmp.eq.s32.totalorder %s23, 0
      %p183 = por %p181, %p182
      %p184 = scmp.ne.s32.totalorder %s170, %s171
      %p185 = scmp.eq.s32.totalorder %s24, 1
      %p186 = por %p184, %p185
      %p188 = scmp.ne.s32.totalorder %s171, %s187
      %p189 = scmp.eq.s32.totalorder %s24, 0
      %p190 = por %p188, %p189
      %p191 = scmp.le.s32.totalorder 1, %s18
      %p192 = scmp.lt.s32.totalorder %s18, 3
      %p193 = pnand %p191, %p192
      %p194 = pneg %p193
      // Predicated region
      $region9: #{tpu_custom_call.1} parent=5 // pred_check
        _
      $region10: #{tpu_custom_call.1} parent=5 // pred_check_branch
        %196 = sbr.rel (%p193) target = $region12
      $region11: #{tpu_custom_call.1} parent=5 // pred_region
        %s197 = ssub.s32 %s18, 1
        // Predicated region
        $region13: #{tpu_custom_call.1} parent=11 // pred_check
          %p198 = pneg %p99
        $region14: #{tpu_custom_call.1} parent=11 // pred_check_branch
          %200 = sbr.rel (%p198) target = $region16
        $region15: #{tpu_custom_call.1} parent=11 // pred_region
          %s201 = ssub.s32 1, %s29
          %s202 = smul.u32 %s30, %s201
          %s203 = smul.u32 32, %s202
          %s205 = ssub.s32 4096, 4096
          %206 = vsyncadd [#allocation9], %s205
          %s207 = smul.addr %s203, 128
          %s208 = scalar_lea.hbm %s1, %s207
          %s209 = sshll.u32 [#allocation8], 4
          %s210 = int_to_ptr.vmem [resolvable:$true] %s209
          %215 = dma.hbm_to_vmem [thread:$0]  %s208, 4096, %s210, [#allocation9], 128, 128, 8
        $region16: #{tpu_custom_call.1} parent=11 // pred_fallthru
          _
        // Predicated region
        $region17: #{tpu_custom_call.1} parent=11 // pred_check
          %p216 = pneg %p127
        $region18: #{tpu_custom_call.1} parent=11 // pred_check_branch
          %218 = sbr.rel (%p216) target = $region20
        $region19: #{tpu_custom_call.1} parent=11 // pred_region
          %s219 = smul.u32 %s30, %s29
          %s220 = smul.u32 2, %s219
          %s222 = ssub.s32 4096, 4096
          %223 = vsyncadd [#allocation9], %s222
          %s224 = smul.addr %s220, 128
          %s225 = scalar_lea.hbm %s2, %s224
          %s226 = sshll.u32 [#allocation10], 4
          %s227 = int_to_ptr.vmem [resolvable:$true] %s226
          %232 = dma.hbm_to_vmem [thread:$0]  %s225, 4096, %s227, [#allocation9], 256, 256, 16
        $region20: #{tpu_custom_call.1} parent=11 // pred_fallthru
          _
      $region12: #{tpu_custom_call.1} parent=5 // pred_fallthru
        _
      %p233 = scmp.lt.s32.totalorder %s18, 2
      // Predicated region
      $region21: #{tpu_custom_call.1} parent=5 // pred_check
        %p234 = pneg %p233
      $region22: #{tpu_custom_call.1} parent=5 // pred_check_branch
        %236 = sbr.rel (%p234) target = $region24
      $region23: #{tpu_custom_call.1} parent=5 // pred_region
        // Predicated region
        $region25: #{tpu_custom_call.1} parent=23 // pred_check
          %p237 = pneg %p63
        $region26: #{tpu_custom_call.1} parent=23 // pred_check_branch
          %239 = sbr.rel (%p237) target = $region28
        $region27: #{tpu_custom_call.1} parent=23 // pred_region
          %s240 = sand.u32 %s53, 1
          %s241 = scalar_lea.sflag [#allocation6], %s240
          %s242 = sand.u32 %s53, 1
          %s243 = smul.addr %s242, 16
          %s244 = scalar_lea.vmem [#allocation5], %s243
          %s245 = ssub.s32 1, %s26
          %s246 = smul.u32 %s27, %s245
          %s247 = smul.u32 2, %s246
          %s249 = ssub.s32 256, 256
          %250 = vsyncadd %s241, %s249
          %s251 = smul.addr %s25, 2
          %s252 = sadd.s32 %s247, %s251
          %s253 = smul.addr %s252, 128
          %s254 = scalar_lea.hbm %s0, %s253
          %s256 = sshll.u32 %s244, 4
          %s257 = int_to_ptr.vmem [resolvable:$true] %s256
          %259 = dma.hbm_to_vmem [thread:$0]  %s254, 256, %s257, %s241
        $region28: #{tpu_custom_call.1} parent=23 // pred_fallthru
          _
      $region24: #{tpu_custom_call.1} parent=5 // pred_fallthru
        _
      %p260 = scmp.le.s32.totalorder 1, %s18
      %p261 = scmp.lt.s32.totalorder %s18, 3
      %p262 = pnand %p260, %p261
      %p263 = pneg %p262
      // Predicated region
      $region29: #{tpu_custom_call.1} parent=5 // pred_check
        _
      $region30: #{tpu_custom_call.1} parent=5 // pred_check_branch
        %265 = sbr.rel (%p262) target = $region32
      $region31: #{tpu_custom_call.1} parent=5 // pred_region
        %s266 = ssub.s32 %s18, 1
        %s267 = sand.u32 %s56, 1
        %s268 = scalar_lea.sflag [#allocation6], %s267
        %s269 = sand.u32 %s56, 1
        %s270 = smul.addr %s269, 16
        %s271 = scalar_lea.vmem [#allocation5], %s270
        // Predicated region
        $region33: #{tpu_custom_call.1} parent=31 // pred_check
          %p272 = pneg %p69
        $region34: #{tpu_custom_call.1} parent=31 // pred_check_branch
          %274 = sbr.rel (%p272) target = $region36
        $region35: #{tpu_custom_call.1} parent=31 // pred_region
          %275 = dma.done %s268, 256
        $region36: #{tpu_custom_call.1} parent=31 // pred_fallthru
          _
        // Predicated region
        $region37: #{tpu_custom_call.1} parent=31 // pred_check
          %p276 = pneg %p99
        $region38: #{tpu_custom_call.1} parent=31 // pred_check_branch
          %278 = sbr.rel (%p276) target = $region40
        $region39: #{tpu_custom_call.1} parent=31 // pred_region
          %279 = dma.done [#allocation9], 4096
        $region40: #{tpu_custom_call.1} parent=31 // pred_fallthru
          _
        // Predicated region
        $region41: #{tpu_custom_call.1} parent=31 // pred_check
          %p280 = pneg %p127
        $region42: #{tpu_custom_call.1} parent=31 // pred_check_branch
          %282 = sbr.rel (%p280) target = $region44
        $region43: #{tpu_custom_call.1} parent=31 // pred_region
          %283 = dma.done [#allocation9], 4096
        $region44: #{tpu_custom_call.1} parent=31 // pred_fallthru
          _
        %s284 = sand.u32 %s56, 1
        %s285 = scalar_lea.sflag [#allocation6], %s284
        %s286 = sand.u32 %s56, 1
        %s287 = smul.addr %s286, 16
        %s288 = scalar_lea.vmem [#allocation5], %s287
        %p289 = pneg %p69
        %p290 = pneg %p66
        %p291 = pneg %p99
        %p292 = pneg %p96
        %p293 = pneg %p127
        %p294 = pneg %p124
        %p295 = pneg %p157
        %p296 = pneg %p154
        %s297 = sand.u32 %s144, 1
        %s298 = scalar_lea.sflag [#allocation7], %s297
        %s299 = sand.u32 %s144, 1
        %s300 = smul.addr %s299, 16
        %s301 = scalar_lea.vmem [#allocation11], %s300
        %p302 = pneg %p183
        %p303 = pneg %p180
        %p304 = scmp.lt.s32.totalorder %s28, 0
        %s305 = scalar_select %p304, %s28, 0
        %s306 = smul.addr %s305, 8
        %s307 = scalar_lea.vmem %s4, %s306
        %s308 = ssub.s32 1, %s29
        %s309 = smul.u32 %s30, %s308
        %s310 = smul.u32 2, %s309
        %s311 = ssub.s32 1, %s29
        %s312 = smul.u32 %s30, %s311
        %s313 = smul.u32 32, %s312
        %s314 = smul.u32 %s30, %s29
        %s315 = smul.u32 2, %s314
        %s316 = smul.u32 %s30, %s29
        %s317 = smul.u32 2, %s316
        %p318 = scmp.lt.s32.totalorder %s28, 0
        %s319 = scalar_select %p318, %s28, 0
        %s320 = smul.addr %s319, 8
        %s321 = scalar_lea.vmem %s4, %s320
        %p322 = scmp.eq.s32.totalorder %s29, 0
        %p323 = scmp.eq.s32.totalorder %s30, 0
        %p324 = pnand %p322, %p323
        %p325 = pneg %p324
        // Predicated region
        $region45: #{tpu_custom_call.1} parent=31 // pred_check
          _
        $region46: #{tpu_custom_call.1} parent=31 // pred_check_branch
          %327 = sbr.rel (%p324) target = $region48
        $region47: #{tpu_custom_call.1} parent=31 // pred_region
          %328 = vst [vmem:[#allocation2] sm:$0xff] 0.0
          %vm329 = vcmask 7168
          %330 = vst.msk [vmem:[#allocation3] sm:$0xff] %vm329, -1e+30
          %331 = vst.msk [vmem:[#allocation4] sm:$0xff] %vm329, 0.0
        $region48: #{tpu_custom_call.1} parent=31 // pred_fallthru
          _
        // Predicated region
        $region49: #{tpu_custom_call.1} parent=31 // pred_check
          %p332 = pneg %p322
        $region50: #{tpu_custom_call.1} parent=31 // pred_check_branch
          %334 = sbr.rel (%p332) target = $region52
        $region51: #{tpu_custom_call.1} parent=31 // pred_region
          %v335 = vld [vmem:[%s271] sm:$0xff]
          %v336 = vld [vmem:[%s271 + $0x8] sm:$0xff]
          %v337 = vld [vmem:[#allocation2] sm:$0xff]
          %v338 = vld [vmem:[#allocation8] sm:$0xff]
          %v339 = vld [vmem:[#allocation8 + $0x8] sm:$0xff]
          %v340 = vld [vmem:[#allocation8 + $0x10] sm:$0xff]
          %v341 = vld [vmem:[#allocation8 + $0x18] sm:$0xff]
          %v342 = vld [vmem:[#allocation8 + $0x20] sm:$0xff]
          %v343 = vld [vmem:[#allocation8 + $0x28] sm:$0xff]
          %v344 = vld [vmem:[#allocation8 + $0x30] sm:$0xff]
          %v345 = vld [vmem:[#allocation8 + $0x38] sm:$0xff]
          %v346 = vld [vmem:[#allocation8 + $0x40] sm:$0xff]
          %v347 = vld [vmem:[#allocation8 + $0x48] sm:$0xff]
          %v348 = vld [vmem:[#allocation8 + $0x50] sm:$0xff]
          %v349 = vld [vmem:[#allocation8 + $0x58] sm:$0xff]
          %v350 = vld [vmem:[#allocation8 + $0x60] sm:$0xff]
          %v351 = vld [vmem:[#allocation8 + $0x68] sm:$0xff]
          %v352 = vld [vmem:[#allocation8 + $0x70] sm:$0xff]
          %v353 = vld [vmem:[#allocation8 + $0x78] sm:$0xff]
          %v354 = vld [vmem:[#allocation8 + $0x80] sm:$0xff]
          %v355 = vld [vmem:[#allocation8 + $0x88] sm:$0xff]
          %v356 = vld [vmem:[#allocation8 + $0x90] sm:$0xff]
          %v357 = vld [vmem:[#allocation8 + $0x98] sm:$0xff]
          %v358 = vld [vmem:[#allocation8 + $0xa0] sm:$0xff]
          %v359 = vld [vmem:[#allocation8 + $0xa8] sm:$0xff]
          %v360 = vld [vmem:[#allocation8 + $0xb0] sm:$0xff]
          %v361 = vld [vmem:[#allocation8 + $0xb8] sm:$0xff]
          %v362 = vld [vmem:[#allocation8 + $0xc0] sm:$0xff]
          %v363 = vld [vmem:[#allocation8 + $0xc8] sm:$0xff]
          %v364 = vld [vmem:[#allocation8 + $0xd0] sm:$0xff]
          %v365 = vld [vmem:[#allocation8 + $0xd8] sm:$0xff]
          %v366 = vld [vmem:[#allocation8 + $0xe0] sm:$0xff]
          %v367 = vld [vmem:[#allocation8 + $0xe8] sm:$0xff]
          %v368 = vld [vmem:[#allocation8 + $0xf0] sm:$0xff]
          %v369 = vld [vmem:[#allocation8 + $0xf8] sm:$0xff]
          %370 = vmatprep.subr.mxu0 0.0
          %371 = vmatpush1.msra.mxu0 %v353
          %372 = vmatprep.subr.mxu0 0.0
          %373 = vmatpush1.msra.mxu0 %v352
          %374 = vmatprep.subr.mxu0 0.0
          %375 = vmatpush1.msra.mxu0 %v351
          %376 = vmatprep.subr.mxu0 0.0
          %377 = vmatpush1.msra.mxu0 %v350
          %378 = vmatprep.subr.mxu0 0.0
          %379 = vmatpush1.msra.mxu0 %v349
          %380 = vmatprep.subr.mxu0 0.0
          %381 = vmatpush1.msra.mxu0 %v348
          %382 = vmatprep.subr.mxu0 0.0
          %383 = vmatpush1.msra.mxu0 %v347
          %384 = vmatprep.subr.mxu0 0.0
          %385 = vmatpush1.msra.mxu0 %v346
          %386 = vmatprep.subr.mxu0 0.0
          %387 = vmatpush1.msra.mxu0 %v345
          %388 = vmatprep.subr.mxu0 0.0
          %389 = vmatpush1.msra.mxu0 %v344
          %390 = vmatprep.subr.mxu0 0.0
          %391 = vmatpush1.msra.mxu0 %v343
          %392 = vmatprep.subr.mxu0 0.0
          %393 = vmatpush1.msra.mxu0 %v342
          %394 = vmatprep.subr.mxu0 0.0
          %395 = vmatpush1.msra.mxu0 %v341
          %396 = vmatprep.subr.mxu0 0.0
          %397 = vmatpush1.msra.mxu0 %v340
          %398 = vmatprep.subr.mxu0 0.0
          %399 = vmatpush1.msra.mxu0 %v339
          %400 = vmatprep.subr.mxu0 0.0
          %401 = vmatpush1.msra.mxu0 %v338
          %402 = vmatprep.subr.mxu0 0.0
          %403 = vmatpush2.msra.mxu0 %v369
          %404 = vmatprep.subr.mxu0 0.0
          %405 = vmatpush2.msra.mxu0 %v368
          %406 = vmatprep.subr.mxu0 0.0
          %407 = vmatpush2.msra.mxu0 %v367
          %408 = vmatprep.subr.mxu0 0.0
          %409 = vmatpush2.msra.mxu0 %v366
          %410 = vmatprep.subr.mxu0 0.0
          %411 = vmatpush2.msra.mxu0 %v365
          %412 = vmatprep.subr.mxu0 0.0
          %413 = vmatpush2.msra.mxu0 %v364
          %414 = vmatprep.subr.mxu0 0.0
          %415 = vmatpush2.msra.mxu0 %v363
          %416 = vmatprep.subr.mxu0 0.0
          %417 = vmatpush2.msra.mxu0 %v362
          %418 = vmatprep.subr.mxu0 0.0
          %419 = vmatpush2.msra.mxu0 %v361
          %420 = vmatprep.subr.mxu0 0.0
          %421 = vmatpush2.msra.mxu0 %v360
          %422 = vmatprep.subr.mxu0 0.0
          %423 = vmatpush2.msra.mxu0 %v359
          %424 = vmatprep.subr.mxu0 0.0
          %425 = vmatpush2.msra.mxu0 %v358
          %426 = vmatprep.subr.mxu0 0.0
          %427 = vmatpush2.msra.mxu0 %v357
          %428 = vmatprep.subr.mxu0 0.0
          %429 = vmatpush2.msra.mxu0 %v356
          %430 = vmatprep.subr.mxu0 0.0
          %431 = vmatpush2.msra.mxu0 %v355
          %432 = vmatprep.subr.mxu0 0.0
          %433 = vmatpush2.msra.mxu0 %v354
          %434 = vmatprep.mubr.f32.mxu0 %v336
          %435 = vmatmul.mubr.f32.gmra.mxu0 %v335
          %v436 = vpop.f32.mrf.mxu0
          %v437 = vadd.f32 0.0, %v436
          %v438 = vpop.f32.mrf.mxu0
          %439 = vdwg.mxu0
          %v440 = vadd.f32 %v337, %v437
          %441 = vst [vmem:[#allocation2] sm:$0xff] %v440
        $region52: #{tpu_custom_call.1} parent=31 // pred_fallthru
          _
        %p442 = scmp.eq.s32.totalorder %s29, 1
        // Predicated region
        $region53: #{tpu_custom_call.1} parent=31 // pred_check
          %p443 = pneg %p442
        $region54: #{tpu_custom_call.1} parent=31 // pred_check_branch
          %445 = sbr.rel (%p443) target = $region56
        $region55: #{tpu_custom_call.1} parent=31 // pred_region
          %v446 = vld [vmem:[#allocation2] sm:$0xff]
          %v447 = vld [vmem:[#allocation10] sm:$0xff]
          %v448 = vld [vmem:[#allocation10 + $0x8] sm:$0xff]
          %v449 = vld [vmem:[#allocation10 + $0x10] sm:$0xff]
          %v450 = vld [vmem:[#allocation10 + $0x18] sm:$0xff]
          %v451 = vld [vmem:[#allocation10 + $0x20] sm:$0xff]
          %v452 = vld [vmem:[#allocation10 + $0x28] sm:$0xff]
          %v453 = vld [vmem:[#allocation10 + $0x30] sm:$0xff]
          %v454 = vld [vmem:[#allocation10 + $0x38] sm:$0xff]
          %v455 = vld [vmem:[#allocation10 + $0x40] sm:$0xff]
          %v456 = vld [vmem:[#allocation10 + $0x48] sm:$0xff]
          %v457 = vld [vmem:[#allocation10 + $0x50] sm:$0xff]
          %v458 = vld [vmem:[#allocation10 + $0x58] sm:$0xff]
          %v459 = vld [vmem:[#allocation10 + $0x60] sm:$0xff]
          %v460 = vld [vmem:[#allocation10 + $0x68] sm:$0xff]
          %v461 = vld [vmem:[#allocation10 + $0x70] sm:$0xff]
          %v462 = vld [vmem:[#allocation10 + $0x78] sm:$0xff]
          %v463 = vld [vmem:[#allocation10 + $0x80] sm:$0xff]
          %v464 = vld [vmem:[#allocation10 + $0x88] sm:$0xff]
          %v465 = vld [vmem:[#allocation10 + $0x90] sm:$0xff]
          %v466 = vld [vmem:[#allocation10 + $0x98] sm:$0xff]
          %v467 = vld [vmem:[#allocation10 + $0xa0] sm:$0xff]
          %v468 = vld [vmem:[#allocation10 + $0xa8] sm:$0xff]
          %v469 = vld [vmem:[#allocation10 + $0xb0] sm:$0xff]
          %v470 = vld [vmem:[#allocation10 + $0xb8] sm:$0xff]
          %v471 = vld [vmem:[#allocation10 + $0xc0] sm:$0xff]
          %v472 = vld [vmem:[#allocation10 + $0xc8] sm:$0xff]
          %v473 = vld [vmem:[#allocation10 + $0xd0] sm:$0xff]
          %v474 = vld [vmem:[#allocation10 + $0xd8] sm:$0xff]
          %v475 = vld [vmem:[#allocation10 + $0xe0] sm:$0xff]
          %v476 = vld [vmem:[#allocation10 + $0xe8] sm:$0xff]
          %v477 = vld [vmem:[#allocation10 + $0xf0] sm:$0xff]
          %v478 = vld [vmem:[#allocation10 + $0xf8] sm:$0xff]
          %479 = vmatprep.subr.mxu0 %v478
          %480 = vmatpush1.msra.mxu0 %v477
          %481 = vmatprep.subr.mxu0 %v476
          %482 = vmatpush1.msra.mxu0 %v475
          %483 = vmatprep.subr.mxu0 %v474
          %484 = vmatpush1.msra.mxu0 %v473
          %485 = vmatprep.subr.mxu0 %v472
          %486 = vmatpush1.msra.mxu0 %v471
          %487 = vmatprep.subr.mxu0 %v470
          %488 = vmatpush1.msra.mxu0 %v469
          %489 = vmatprep.subr.mxu0 %v468
          %490 = vmatpush1.msra.mxu0 %v467
          %491 = vmatprep.subr.mxu0 %v466
          %492 = vmatpush1.msra.mxu0 %v465
          %493 = vmatprep.subr.mxu0 %v464
          %494 = vmatpush1.msra.mxu0 %v463
          %495 = vmatprep.subr.mxu0 %v462
          %496 = vmatpush1.msra.mxu0 %v461
          %497 = vmatprep.subr.mxu0 %v460
          %498 = vmatpush1.msra.mxu0 %v459
          %499 = vmatprep.subr.mxu0 %v458
          %500 = vmatpush1.msra.mxu0 %v457
          %501 = vmatprep.subr.mxu0 %v456
          %502 = vmatpush1.msra.mxu0 %v455
          %503 = vmatprep.subr.mxu0 %v454
          %504 = vmatpush1.msra.mxu0 %v453
          %505 = vmatprep.subr.mxu0 %v452
          %506 = vmatpush1.msra.mxu0 %v451
          %507 = vmatprep.subr.mxu0 %v450
          %508 = vmatpush1.msra.mxu0 %v449
          %509 = vmatprep.subr.mxu0 %v448
          %510 = vmatpush1.msra.mxu0 %v447
          %511 = vmatprep.subr.mxu0 0.0
          %512 = vmatpush2.msra.mxu0 0.0
          %513 = vmatprep.subr.mxu0 0.0
          %514 = vmatpush2.msra.mxu0 0.0
          %515 = vmatprep.subr.mxu0 0.0
          %516 = vmatpush2.msra.mxu0 0.0
          %517 = vmatprep.subr.mxu0 0.0
          %518 = vmatpush2.msra.mxu0 0.0
          %519 = vmatprep.subr.mxu0 0.0
          %520 = vmatpush2.msra.mxu0 0.0
          %521 = vmatprep.subr.mxu0 0.0
          %522 = vmatpush2.msra.mxu0 0.0
          %523 = vmatprep.subr.mxu0 0.0
          %524 = vmatpush2.msra.mxu0 0.0
          %525 = vmatprep.subr.mxu0 0.0
          %526 = vmatpush2.msra.mxu0 0.0
          %527 = vmatprep.subr.mxu0 0.0
          %528 = vmatpush2.msra.mxu0 0.0
          %529 = vmatprep.subr.mxu0 0.0
          %530 = vmatpush2.msra.mxu0 0.0
          %531 = vmatprep.subr.mxu0 0.0
          %532 = vmatpush2.msra.mxu0 0.0
          %533 = vmatprep.subr.mxu0 0.0
          %534 = vmatpush2.msra.mxu0 0.0
          %535 = vmatprep.subr.mxu0 0.0
          %536 = vmatpush2.msra.mxu0 0.0
          %537 = vmatprep.subr.mxu0 0.0
          %538 = vmatpush2.msra.mxu0 0.0
          %539 = vmatprep.subr.mxu0 0.0
          %540 = vmatpush2.msra.mxu0 0.0
          %541 = vmatprep.subr.mxu0 0.0
          %542 = vmatpush2.msra.mxu0 0.0
          %543 = vmatprep.mubr.f32.mxu0 0.0
          %544 = vmatmul.mubr.f32.gmra.mxu0 %v446
          %v545 = vpop.f32.mrf.mxu0
          %v546 = vadd.f32 0.0, %v545
          %v547 = vpop.f32.mrf.mxu0
          %v548 = vadd.f32 0.0, %v547
          %549 = vdwg.mxu0
          %v550 = vld [vmem:[#allocation3] sm:$0xff]
          %v551 = vmax.f32 %v546, %v548
          %552 = vmax.xlane.f32.xlu0 %v551
          %v553 = vpop.xlane.xlu0 %552
          %v554 = vmax.f32 %v550, %v553
          %v555 = vsub.f32 %v550, %v554
          %v556 = vmul.f32 %v555, 1.442695
          %v557 = vpow.pop %v556
          %559 = vset.pattern.permute.xlu0 0
          %560 = vperm.xlu0 %559, %v554
          %v561 = vpop.permute.xlu0 %560
          %v563 = vsub.f32 %v546, %v561
          %v564 = vsub.f32 %v548, %v561
          %v565 = vmul.f32 %v563, 1.442695
          %v566 = vpow.pop %v565
          %v567 = vmul.f32 %v564, 1.442695
          %v568 = vpow.pop %v567
          %v569 = vld [vmem:[#allocation4] sm:$0xff]
          %v570 = vmul.f32 %v557, %v569
          %v571 = vadd.f32 %v566, %v568
          %572 = vadd.xlane.f32.xlu0 %v571
          %v573 = vpop.xlane.xlu0 %572
          %v574 = vadd.f32 %v570, %v573
          %vm575 = vcmask 7168
          %576 = vst.msk [vmem:[#allocation3] sm:$0xff] %vm575, %v554
          %577 = vst.msk [vmem:[#allocation4] sm:$0xff] %vm575, %v574
          %v578 = vlog2.pop %v574
          %v579 = vmul.f32 %v578, 0.6931472
          %v580 = vadd.f32 %v554, %v579
          %582 = vset.pattern.permute.xlu0 0
          %583 = vperm.xlu0 %582, %v580
          %v584 = vpop.permute.xlu0 %583
          %v586 = vsub.f32 %v546, %v584
          %v587 = vsub.f32 %v548, %v584
          %588 = vst [vmem:[%s301] sm:$0xff] %v586
          %589 = vst [vmem:[%s301 + $0x8] sm:$0xff] %v587
          // Predicated region
          $region57: #{tpu_custom_call.1} parent=55 // pred_check
            %p590 = pneg %p323
          $region58: #{tpu_custom_call.1} parent=55 // pred_check_branch
            %592 = sbr.rel (%p590) target = $region60
          $region59: #{tpu_custom_call.1} parent=55 // pred_region
            %v593 = vld [vmem:[#allocation3] sm:$0xff]
            %v594 = vld [vmem:[#allocation4] sm:$0xff]
            %v595 = vlog2.pop %v594
            %v596 = vmul.f32 %v595, 0.6931472
            %v597 = vadd.f32 %v593, %v596
            %598 = vst.msk [vmem:[%s321] sm:$0xff] %vm575, %v597
          $region60: #{tpu_custom_call.1} parent=55 // pred_fallthru
            _
        $region56: #{tpu_custom_call.1} parent=31 // pred_fallthru
          _
        %s599 = sand.u32 %s144, 1
        %s600 = scalar_lea.sflag [#allocation7], %s599
        %s601 = sand.u32 %s144, 1
        %s602 = smul.addr %s601, 16
        %s603 = scalar_lea.vmem [#allocation11], %s602
        %p604 = scmp.lt.s32.totalorder %s28, 0
        %s605 = scalar_select %p604, %s28, 0
        %s606 = smul.addr %s605, 8
        %s607 = scalar_lea.vmem %s4, %s606
        // Predicated region
        $region61: #{tpu_custom_call.1} parent=31 // pred_check
          %p608 = pneg %p154
        $region62: #{tpu_custom_call.1} parent=31 // pred_check_branch
          %610 = sbr.rel (%p608) target = $region64
        $region63: #{tpu_custom_call.1} parent=31 // pred_region
          %s611 = smul.u32 %s30, %s29
          %s612 = smul.u32 2, %s611
          %s614 = ssub.s32 256, 256
          %615 = vsyncadd %s600, %s614
          %s616 = smul.addr %s28, 2
          %s617 = sadd.s32 %s612, %s616
          %s618 = smul.addr %s617, 128
          %s619 = scalar_lea.hbm %s3, %s618
          %s621 = sshll.u32 %s603, 4
          %s622 = int_to_ptr.vmem [resolvable:$true] %s621
          %624 = dma.vmem_to_hbm [thread:$0]  %s622, 256, %s619, %s600
        $region64: #{tpu_custom_call.1} parent=31 // pred_fallthru
          _
        // Predicated region
        $region65: #{tpu_custom_call.1} parent=31 // pred_check
          %p625 = pneg %p180
        $region66: #{tpu_custom_call.1} parent=31 // pred_check_branch
          %627 = sbr.rel (%p625) target = $region68
        $region67: #{tpu_custom_call.1} parent=31 // pred_region
          _
        $region68: #{tpu_custom_call.1} parent=31 // pred_fallthru
          _
        // Predicated region
        $region69: #{tpu_custom_call.1} parent=31 // pred_check
          %p628 = pneg %p180
        $region70: #{tpu_custom_call.1} parent=31 // pred_check_branch
          %630 = sbr.rel (%p628) target = $region72
        $region71: #{tpu_custom_call.1} parent=31 // pred_region
          %p631 = scmp.lt.s32.totalorder %s28, 0
          %s632 = scalar_select %p631, %s28, 0
          %s633 = smul.addr %s632, 8
          %s634 = scalar_lea.vmem %s4, %s633
        $region72: #{tpu_custom_call.1} parent=31 // pred_fallthru
          _
      $region32: #{tpu_custom_call.1} parent=5 // pred_fallthru
        _
      %p635 = scmp.le.s32.totalorder 2, %s18
      // Predicated region
      $region73: #{tpu_custom_call.1} parent=5 // pred_check
        %p636 = pneg %p635
      $region74: #{tpu_custom_call.1} parent=5 // pred_check_branch
        %638 = sbr.rel (%p636) target = $region76
      $region75: #{tpu_custom_call.1} parent=5 // pred_region
        %s639 = ssub.s32 %s18, 2
        // Predicated region
        $region77: #{tpu_custom_call.1} parent=75 // pred_check
          %p640 = pneg %p160
        $region78: #{tpu_custom_call.1} parent=75 // pred_check_branch
          %642 = sbr.rel (%p640) target = $region80
        $region79: #{tpu_custom_call.1} parent=75 // pred_region
          %s643 = sand.u32 %s145, 1
          %s644 = scalar_lea.sflag [#allocation7], %s643
          %s645 = sand.u32 %s145, 1
          %s646 = smul.addr %s645, 16
          %s647 = scalar_lea.vmem [#allocation11], %s646
          %648 = dma.done %s644, 256
        $region80: #{tpu_custom_call.1} parent=75 // pred_fallthru
          _
      $region76: #{tpu_custom_call.1} parent=5 // pred_fallthru
        _
    $region6: #{tpu_custom_call.1} parent=1 // loop_footer
      %s22 = sadd.s32 1, %s18
    $region7: #{tpu_custom_call.1} parent=1 // loop_footer_branch
      %17 = sbr.rel target = $region3
    $region8: #{tpu_custom_call.1} parent=1 // loop_exit
      _
    %649 = vsyncpa [#allocation6], 1
    %s650 = scalar_lea.sflag [#allocation6], 1
    %651 = vsyncpa %s650, 1
    %652 = vsyncpa [#allocation9], 1
    %653 = vsyncpa [#allocation7], 1
    %s654 = scalar_lea.sflag [#allocation7], 1
    %655 = vsyncpa %s654, 1

// kernel: tpu_custom_call.1
$region0: #{tpu_custom_call.1}
  #allocation0 [shape = 'u32[]', space=smem, size = 0x4, offset = 0x4, fixed_abs, tag = 'smem constant byte address 0x4 - core index']
  #allocation1 [shape = 'u32[144,128]{1,0:T(1,128)}', space=vmem, size = 0x12000, scoped, tag = 'internal scratch']
  #allocation2 [shape = 'f32[8,128]{1,0:T(8,128)}', space=vmem, size = 0x1000, scoped, tag = 'scratch operand']
  #allocation3 [shape = 'f32[8,1]{1,0:T(8,128)}', space=vmem, size = 0x1000, scoped, tag = 'scratch operand']
  #allocation4 [shape = 'f32[8,1]{1,0:T(8,128)}', space=vmem, size = 0x1000, scoped, tag = 'scratch operand']
  %s0 = inlined_call_operand.hbm [shape: f32[8,256], index: 0, kind: input, shape index: {}]
  %s1 = inlined_call_operand.hbm [shape: f32[256,128], index: 1, kind: input, shape index: {}]
  %s2 = inlined_call_operand.hbm [shape: f32[128,256], index: 2, kind: input, shape index: {}]
  %s3 = inlined_call_operand.hbm [shape: f32[8,256], index: 3, kind: output, shape index: {0}]
  %s4 = inlined_call_operand.vmem [shape: f32[8,1], index: 4, kind: output, shape index: {1}]
  %5 = xla_tuple %s3, %s4
  %s6 = sld [smem:[#allocation0]]
  $region81: #{tpu_custom_call.1} parent=0
    _
  %s8 = ssub.s32 1, %s6
  %s9 = scalar_select 0, %s8, %s6
  $region1: #{tpu_custom_call.1} parent=0
    #allocation5 [shape = 'u8[16384]{0}', space=vmem, size = 0x4000, scoped, tag = 'input window, operand 0']
    #allocation6 [shape = 's32[2]{0}', space=sflag, size = 0x8, scoped, tag = 'scoped memory for tpu_custom_call.1']
    #allocation7 [shape = 's32[2]{0}', space=sflag, size = 0x8, scoped, tag = 'scoped memory for tpu_custom_call.1']
    #allocation8 [shape = 'u8[262144]{0}', space=vmem, size = 0x40000, scoped, tag = 'input window, operand 1']
    #allocation9 [shape = 's32[2]{0}', space=sflag, size = 0x8, scoped, tag = 'scoped memory for tpu_custom_call.1']
    #allocation10 [shape = 'u8[262144]{0}', space=vmem, size = 0x40000, scoped, tag = 'input window, operand 2']
    #allocation11 [shape = 'u8[16384]{0}', space=vmem, size = 0x4000, scoped, tag = 'output window, operand 0']
    %10 = vsyncpa [#allocation6], 0
    %s11 = scalar_lea.sflag [#allocation6], 1
    %12 = vsyncpa %s11, 0
    %13 = vsyncpa [#allocation9], 0
    %s14 = scalar_lea.sflag [#allocation9], 1
    %15 = vsyncpa %s14, 0
    %16 = vsyncpa [#allocation7], 0
    %s17 = scalar_lea.sflag [#allocation7], 1
    %18 = vsyncpa %s17, 0
    loop: start=0, step=1, limit=4
    $region2: #{tpu_custom_call.1} parent=1 // loop_pre_header
      _
    $region3: #{tpu_custom_call.1} parent=1 // loop_header
      %s20 = sphi 0, %s24
      %p21 = scmp.ge.s32.totalorder %s20, 4
      %s27 = sphi 0, %s46
      %s28 = sphi 0, %s42
      %s29 = sphi 0, %s38
      %s30 = sphi 0, %s27
      %s31 = sphi 0, %s28
      %s32 = sphi 0, %s29
      %s33 = sphi 0, %s30
      %s34 = sphi 0, %s31
      %s35 = sphi 0, %s32
      %s55 = sphi 0, %s57
      %s58 = sphi 0, %s55
      %s59 = sphi 0, %s58
      %s75 = sphi 0, %s59
      %s85 = sphi 0, %s87
      %s88 = sphi 0, %s85
      %s89 = sphi 0, %s88
      %s105 = sphi 0, %s89
      %s113 = sphi 0, %s115
      %s116 = sphi 0, %s113
      %s117 = sphi 0, %s116
      %s133 = sphi 0, %s117
      %s143 = sphi 0, %s145
      %s146 = sphi 0, %s143
      %s147 = sphi 0, %s146
      %s163 = sphi 0, %s147
      %s169 = sphi 0, %s171
      %s172 = sphi 0, %s169
      %s173 = sphi 0, %s172
      %s189 = sphi 0, %s173
    $region4: #{tpu_custom_call.1} parent=1 // loop_header_branch
      %23 = sbr.rel (%p21) target = $region8
    $region5: #{tpu_custom_call.1} parent=1 // loop_body
      %s25 = ssub.s32 %s20, 1
      %s26 = ssub.s32 %s20, 2
      %s36 = sadd.s32 1, %s29
      %p37 = scmp.ge.s32.totalorder %s36, 1
      %s38 = scalar_select %p37, 0, %s36
      %s39 = sadd.s32 1, %s28
      %s40 = scalar_select %p37, %s39, %s28
      %p41 = scmp.ge.s32.totalorder %s40, 2
      %s42 = scalar_select %p41, 0, %s40
      %s43 = sadd.s32 1, %s27
      %s44 = scalar_select %p41, %s43, %s27
      %p45 = scmp.ge.s32.totalorder %s44, 1
      %s46 = scalar_select %p45, 0, %s44
      %s47 = ssub.s32 1, %s28
      %s48 = smul.u32 %s29, %s47
      %s49 = ssub.s32 1, %s42
      %s50 = smul.u32 %s38, %s49
      %s51 = ssub.s32 %s27, %s46
      %s52 = ssub.s32 %s48, %s50
      %s53 = sor.u32 %s51, %s52
      %p54 = scmp.eq.s32.totalorder %s53, 0
      %s56 = sadd.s32 %s55, 1
      %s57 = scalar_select %p54, %s55, %s56
      %p60 = pneg %p54
      %p61 = scmp.eq.s32.totalorder %s20, 1
      %p62 = por %p60, %p61
      %p63 = scmp.ne.s32.totalorder %s55, %s58
      %p64 = scmp.eq.s32.totalorder %s20, 0
      %p65 = por %p63, %p64
      %p66 = scmp.ne.s32.totalorder %s55, %s58
      %p67 = scmp.eq.s32.totalorder %s25, 1
      %p68 = por %p66, %p67
      %p69 = scmp.ne.s32.totalorder %s58, %s59
      %p70 = scmp.eq.s32.totalorder %s25, 0
      %p71 = por %p69, %p70
      %p72 = scmp.ne.s32.totalorder %s58, %s59
      %p73 = scmp.eq.s32.totalorder %s26, 1
      %p74 = por %p72, %p73
      %p76 = scmp.ne.s32.totalorder %s59, %s75
      %p77 = scmp.eq.s32.totalorder %s26, 0
      %p78 = por %p76, %p77
      %s79 = ssub.s32 1, %s28
      %s80 = smul.u32 %s29, %s79
      %s81 = ssub.s32 1, %s42
      %s82 = smul.u32 %s38, %s81
      %s83 = ssub.s32 %s80, %s82
      %p84 = scmp.eq.s32.totalorder %s83, 0
      %s86 = sadd.s32 %s85, 1
      %s87 = scalar_select %p84, %s85, %s86
      %p90 = pneg %p84
      %p91 = scmp.eq.s32.totalorder %s20, 1
      %p92 = por %p90, %p91
      %p93 = scmp.ne.s32.totalorder %s85, %s88
      %p94 = scmp.eq.s32.totalorder %s20, 0
      %p95 = por %p93, %p94
      %p96 = scmp.ne.s32.totalorder %s85, %s88
      %p97 = scmp.eq.s32.totalorder %s25, 1
      %p98 = por %p96, %p97
      %p99 = scmp.ne.s32.totalorder %s88, %s89
      %p100 = scmp.eq.s32.totalorder %s25, 0
      %p101 = por %p99, %p100
      %p102 = scmp.ne.s32.totalorder %s88, %s89
      %p103 = scmp.eq.s32.totalorder %s26, 1
      %p104 = por %p102, %p103
      %p106 = scmp.ne.s32.totalorder %s89, %s105
      %p107 = scmp.eq.s32.totalorder %s26, 0
      %p108 = por %p106, %p107
      %s109 = smul.u32 %s29, %s28
      %s110 = smul.u32 %s38, %s42
      %s111 = ssub.s32 %s109, %s110
      %p112 = scmp.eq.s32.totalorder %s111, 0
      %s114 = sadd.s32 %s113, 1
      %s115 = scalar_select %p112, %s113, %s114
      %p118 = pneg %p112
      %p119 = scmp.eq.s32.totalorder %s20, 1
      %p120 = por %p118, %p119
      %p121 = scmp.ne.s32.totalorder %s113, %s116
      %p122 = scmp.eq.s32.totalorder %s20, 0
      %p123 = por %p121, %p122
      %p124 = scmp.ne.s32.totalorder %s113, %s116
      %p125 = scmp.eq.s32.totalorder %s25, 1
      %p126 = por %p124, %p125
      %p127 = scmp.ne.s32.totalorder %s116, %s117
      %p128 = scmp.eq.s32.totalorder %s25, 0
      %p129 = por %p127, %p128
      %p130 = scmp.ne.s32.totalorder %s116, %s117
      %p131 = scmp.eq.s32.totalorder %s26, 1
      %p132 = por %p130, %p131
      %p134 = scmp.ne.s32.totalorder %s117, %s133
      %p135 = scmp.eq.s32.totalorder %s26, 0
      %p136 = por %p134, %p135
      %s137 = smul.u32 %s29, %s28
      %s138 = smul.u32 %s38, %s42
      %s139 = ssub.s32 %s27, %s46
      %s140 = ssub.s32 %s137, %s138
      %s141 = sor.u32 %s139, %s140
      %p142 = scmp.eq.s32.totalorder %s141, 0
      %s144 = sadd.s32 %s143, 1
      %s145 = scalar_select %p142, %s143, %s144
      %p148 = pneg %p142
      %p149 = scmp.eq.s32.totalorder %s20, 1
      %p150 = por %p148, %p149
      %p151 = scmp.ne.s32.totalorder %s143, %s146
      %p152 = scmp.eq.s32.totalorder %s20, 0
      %p153 = por %p151, %p152
      %p154 = scmp.ne.s32.totalorder %s143, %s146
      %p155 = scmp.eq.s32.totalorder %s25, 1
      %p156 = por %p154, %p155
      %p157 = scmp.ne.s32.totalorder %s146, %s147
      %p158 = scmp.eq.s32.totalorder %s25, 0
      %p159 = por %p157, %p158
      %p160 = scmp.ne.s32.totalorder %s146, %s147
      %p161 = scmp.eq.s32.totalorder %s26, 1
      %p162 = por %p160, %p161
      %p164 = scmp.ne.s32.totalorder %s147, %s163
      %p165 = scmp.eq.s32.totalorder %s26, 0
      %p166 = por %p164, %p165
      %s167 = ssub.s32 %s27, %s46
      %p168 = scmp.eq.s32.totalorder %s167, 0
      %s170 = sadd.s32 %s169, 1
      %s171 = scalar_select %p168, %s169, %s170
      %p174 = pneg %p168
      %p175 = scmp.eq.s32.totalorder %s20, 1
      %p176 = por %p174, %p175
      %p177 = scmp.ne.s32.totalorder %s169, %s172
      %p178 = scmp.eq.s32.totalorder %s20, 0
      %p179 = por %p177, %p178
      %p180 = scmp.ne.s32.totalorder %s169, %s172
      %p181 = scmp.eq.s32.totalorder %s25, 1
      %p182 = por %p180, %p181
      %p183 = scmp.ne.s32.totalorder %s172, %s173
      %p184 = scmp.eq.s32.totalorder %s25, 0
      %p185 = por %p183, %p184
      %p186 = scmp.ne.s32.totalorder %s172, %s173
      %p187 = scmp.eq.s32.totalorder %s26, 1
      %p188 = por %p186, %p187
      %p190 = scmp.ne.s32.totalorder %s173, %s189
      %p191 = scmp.eq.s32.totalorder %s26, 0
      %p192 = por %p190, %p191
      %p193 = scmp.le.s32.totalorder 1, %s20
      %p194 = scmp.lt.s32.totalorder %s20, 3
      %p195 = pnand %p193, %p194
      %p196 = pneg %p195
      // Predicated region
      $region9: #{tpu_custom_call.1} parent=5 // pred_check
        _
      $region10: #{tpu_custom_call.1} parent=5 // pred_check_branch
        %198 = sbr.rel (%p195) target = $region12
      $region11: #{tpu_custom_call.1} parent=5 // pred_region
        %s199 = ssub.s32 %s20, 1
      $region12: #{tpu_custom_call.1} parent=5 // pred_fallthru
        _
      %p200 = scmp.lt.s32.totalorder %s20, 2
      // Predicated region
      $region13: #{tpu_custom_call.1} parent=5 // pred_check
        %p201 = pneg %p200
      $region14: #{tpu_custom_call.1} parent=5 // pred_check_branch
        %203 = sbr.rel (%p201) target = $region16
      $region15: #{tpu_custom_call.1} parent=5 // pred_region
        // Predicated region
        $region17: #{tpu_custom_call.1} parent=15 // pred_check
          %p204 = pneg %p65
        $region18: #{tpu_custom_call.1} parent=15 // pred_check_branch
          %206 = sbr.rel (%p204) target = $region20
        $region19: #{tpu_custom_call.1} parent=15 // pred_region
          %s207 = sand.u32 %s55, 1
          %s208 = scalar_lea.sflag [#allocation6], %s207
          %s209 = sand.u32 %s55, 1
          %s210 = smul.addr %s209, 16
          %s211 = scalar_lea.vmem [#allocation5], %s210
          %s212 = ssub.s32 1, %s28
          %s213 = smul.u32 %s29, %s212
          %s214 = smul.u32 2, %s213
          %s216 = ssub.s32 256, 256
          %217 = vsyncadd %s208, %s216
          %s218 = smul.addr %s27, 2
          %s219 = sadd.s32 %s214, %s218
          %s220 = smul.addr %s219, 128
          %s221 = scalar_lea.hbm %s0, %s220
          %s223 = sshll.u32 %s211, 4
          %s224 = int_to_ptr.vmem [resolvable:$true] %s223
          %226 = dma.hbm_to_vmem [thread:$0]  %s221, 256, %s224, %s208
        $region20: #{tpu_custom_call.1} parent=15 // pred_fallthru
          _
        // Predicated region
        $region21: #{tpu_custom_call.1} parent=15 // pred_check
          %p227 = pneg %p95
        $region22: #{tpu_custom_call.1} parent=15 // pred_check_branch
          %229 = sbr.rel (%p227) target = $region24
        $region23: #{tpu_custom_call.1} parent=15 // pred_region
          %s230 = sand.u32 %s20, 1
          %s231 = scalar_lea.sflag [#allocation9], %s230
          %s232 = sand.u32 %s85, 1
          %s233 = smul.addr %s232, 256
          %s234 = scalar_lea.vmem [#allocation8], %s233
          %s235 = ssub.s32 1, %s28
          %s236 = smul.u32 %s29, %s235
          %s237 = smul.u32 32, %s236
          %s239 = ssub.s32 4096, 4096
          %240 = vsyncadd %s231, %s239
          %s241 = smul.addr %s237, 128
          %s242 = scalar_lea.hbm %s1, %s241
          %s243 = sshll.u32 %s234, 4
          %s244 = int_to_ptr.vmem [resolvable:$true] %s243
          %249 = dma.hbm_to_vmem [thread:$0]  %s242, 4096, %s244, %s231, 128, 128, 8
        $region24: #{tpu_custom_call.1} parent=15 // pred_fallthru
          _
        // Predicated region
        $region25: #{tpu_custom_call.1} parent=15 // pred_check
          %p250 = pneg %p123
        $region26: #{tpu_custom_call.1} parent=15 // pred_check_branch
          %252 = sbr.rel (%p250) target = $region28
        $region27: #{tpu_custom_call.1} parent=15 // pred_region
          %s253 = sand.u32 %s20, 1
          %s254 = scalar_lea.sflag [#allocation9], %s253
          %s255 = sand.u32 %s113, 1
          %s256 = smul.addr %s255, 256
          %s257 = scalar_lea.vmem [#allocation10], %s256
          %s258 = smul.u32 %s29, %s28
          %s259 = smul.u32 2, %s258
          %s261 = ssub.s32 4096, 4096
          %262 = vsyncadd %s254, %s261
          %s263 = smul.addr %s259, 128
          %s264 = scalar_lea.hbm %s2, %s263
          %s265 = sshll.u32 %s257, 4
          %s266 = int_to_ptr.vmem [resolvable:$true] %s265
          %271 = dma.hbm_to_vmem [thread:$0]  %s264, 4096, %s266, %s254, 256, 256, 16
        $region28: #{tpu_custom_call.1} parent=15 // pred_fallthru
          _
      $region16: #{tpu_custom_call.1} parent=5 // pred_fallthru
        _
      %p272 = scmp.le.s32.totalorder 1, %s20
      %p273 = scmp.lt.s32.totalorder %s20, 3
      %p274 = pnand %p272, %p273
      %p275 = pneg %p274
      // Predicated region
      $region29: #{tpu_custom_call.1} parent=5 // pred_check
        _
      $region30: #{tpu_custom_call.1} parent=5 // pred_check_branch
        %277 = sbr.rel (%p274) target = $region32
      $region31: #{tpu_custom_call.1} parent=5 // pred_region
        %s278 = ssub.s32 %s20, 1
        %s279 = sand.u32 %s58, 1
        %s280 = scalar_lea.sflag [#allocation6], %s279
        %s281 = sand.u32 %s58, 1
        %s282 = smul.addr %s281, 16
        %s283 = scalar_lea.vmem [#allocation5], %s282
        // Predicated region
        $region33: #{tpu_custom_call.1} parent=31 // pred_check
          %p284 = pneg %p71
        $region34: #{tpu_custom_call.1} parent=31 // pred_check_branch
          %286 = sbr.rel (%p284) target = $region36
        $region35: #{tpu_custom_call.1} parent=31 // pred_region
          %287 = dma.done %s280, 256
        $region36: #{tpu_custom_call.1} parent=31 // pred_fallthru
          _
        %s288 = sand.u32 %s25, 1
        %s289 = scalar_lea.sflag [#allocation9], %s288
        %s290 = sand.u32 %s88, 1
        %s291 = smul.addr %s290, 256
        %s292 = scalar_lea.vmem [#allocation8], %s291
        // Predicated region
        $region37: #{tpu_custom_call.1} parent=31 // pred_check
          %p293 = pneg %p101
        $region38: #{tpu_custom_call.1} parent=31 // pred_check_branch
          %295 = sbr.rel (%p293) target = $region40
        $region39: #{tpu_custom_call.1} parent=31 // pred_region
          %296 = dma.done %s289, 4096
        $region40: #{tpu_custom_call.1} parent=31 // pred_fallthru
          _
        %s297 = sand.u32 %s25, 1
        %s298 = scalar_lea.sflag [#allocation9], %s297
        %s299 = sand.u32 %s116, 1
        %s300 = smul.addr %s299, 256
        %s301 = scalar_lea.vmem [#allocation10], %s300
        // Predicated region
        $region41: #{tpu_custom_call.1} parent=31 // pred_check
          %p302 = pneg %p129
        $region42: #{tpu_custom_call.1} parent=31 // pred_check_branch
          %304 = sbr.rel (%p302) target = $region44
        $region43: #{tpu_custom_call.1} parent=31 // pred_region
          %305 = dma.done %s298, 4096
        $region44: #{tpu_custom_call.1} parent=31 // pred_fallthru
          _
        %s306 = sand.u32 %s58, 1
        %s307 = scalar_lea.sflag [#allocation6], %s306
        %s308 = sand.u32 %s58, 1
        %s309 = smul.addr %s308, 16
        %s310 = scalar_lea.vmem [#allocation5], %s309
        %p311 = pneg %p71
        %p312 = pneg %p68
        %s313 = sand.u32 %s25, 1
        %s314 = scalar_lea.sflag [#allocation9], %s313
        %s315 = sand.u32 %s88, 1
        %s316 = smul.addr %s315, 256
        %s317 = scalar_lea.vmem [#allocation8], %s316
        %p318 = pneg %p101
        %p319 = pneg %p98
        %s320 = sand.u32 %s25, 1
        %s321 = scalar_lea.sflag [#allocation9], %s320
        %s322 = sand.u32 %s116, 1
        %s323 = smul.addr %s322, 256
        %s324 = scalar_lea.vmem [#allocation10], %s323
        %p325 = pneg %p129
        %p326 = pneg %p126
        %p327 = pneg %p159
        %p328 = pneg %p156
        %s329 = sand.u32 %s146, 1
        %s330 = scalar_lea.sflag [#allocation7], %s329
        %s331 = sand.u32 %s146, 1
        %s332 = smul.addr %s331, 16
        %s333 = scalar_lea.vmem [#allocation11], %s332
        %p334 = pneg %p185
        %p335 = pneg %p182
        %p336 = scmp.lt.s32.totalorder %s30, 0
        %s337 = scalar_select %p336, %s30, 0
        %s338 = smul.addr %s337, 8
        %s339 = scalar_lea.vmem %s4, %s338
        %s340 = ssub.s32 1, %s31
        %s341 = smul.u32 %s32, %s340
        %s342 = smul.u32 2, %s341
        %s343 = ssub.s32 1, %s31
        %s344 = smul.u32 %s32, %s343
        %s345 = smul.u32 32, %s344
        %s346 = smul.u32 %s32, %s31
        %s347 = smul.u32 2, %s346
        %s348 = smul.u32 %s32, %s31
        %s349 = smul.u32 2, %s348
        %p350 = scmp.lt.s32.totalorder %s30, 0
        %s351 = scalar_select %p350, %s30, 0
        %s352 = smul.addr %s351, 8
        %s353 = scalar_lea.vmem %s4, %s352
        %p354 = scmp.eq.s32.totalorder %s31, 0
        %p355 = scmp.eq.s32.totalorder %s32, 0
        %p356 = pnand %p354, %p355
        %p357 = pneg %p356
        // Predicated region
        $region45: #{tpu_custom_call.1} parent=31 // pred_check
          _
        $region46: #{tpu_custom_call.1} parent=31 // pred_check_branch
          %359 = sbr.rel (%p356) target = $region48
        $region47: #{tpu_custom_call.1} parent=31 // pred_region
          %360 = vst [vmem:[#allocation2] sm:$0xff] 0.0
          %vm361 = vcmask 7168
          %362 = vst.msk [vmem:[#allocation3] sm:$0xff] %vm361, -1e+30
          %363 = vst.msk [vmem:[#allocation4] sm:$0xff] %vm361, 0.0
        $region48: #{tpu_custom_call.1} parent=31 // pred_fallthru
          _
        // Predicated region
        $region49: #{tpu_custom_call.1} parent=31 // pred_check
          %p364 = pneg %p354
        $region50: #{tpu_custom_call.1} parent=31 // pred_check_branch
          %366 = sbr.rel (%p364) target = $region52
        $region51: #{tpu_custom_call.1} parent=31 // pred_region
          %v367 = vld [vmem:[%s283] sm:$0xff]
          %v368 = vld [vmem:[%s283 + $0x8] sm:$0xff]
          %v369 = vld [vmem:[#allocation2] sm:$0xff]
          %v370 = vld [vmem:[%s292] sm:$0xff]
          %v371 = vld [vmem:[%s292 + $0x8] sm:$0xff]
          %v372 = vld [vmem:[%s292 + $0x10] sm:$0xff]
          %v373 = vld [vmem:[%s292 + $0x18] sm:$0xff]
          %v374 = vld [vmem:[%s292 + $0x20] sm:$0xff]
          %v375 = vld [vmem:[%s292 + $0x28] sm:$0xff]
          %v376 = vld [vmem:[%s292 + $0x30] sm:$0xff]
          %v377 = vld [vmem:[%s292 + $0x38] sm:$0xff]
          %v378 = vld [vmem:[%s292 + $0x40] sm:$0xff]
          %v379 = vld [vmem:[%s292 + $0x48] sm:$0xff]
          %v380 = vld [vmem:[%s292 + $0x50] sm:$0xff]
          %v381 = vld [vmem:[%s292 + $0x58] sm:$0xff]
          %v382 = vld [vmem:[%s292 + $0x60] sm:$0xff]
          %v383 = vld [vmem:[%s292 + $0x68] sm:$0xff]
          %v384 = vld [vmem:[%s292 + $0x70] sm:$0xff]
          %v385 = vld [vmem:[%s292 + $0x78] sm:$0xff]
          %v386 = vld [vmem:[%s292 + $0x80] sm:$0xff]
          %v387 = vld [vmem:[%s292 + $0x88] sm:$0xff]
          %v388 = vld [vmem:[%s292 + $0x90] sm:$0xff]
          %v389 = vld [vmem:[%s292 + $0x98] sm:$0xff]
          %v390 = vld [vmem:[%s292 + $0xa0] sm:$0xff]
          %v391 = vld [vmem:[%s292 + $0xa8] sm:$0xff]
          %v392 = vld [vmem:[%s292 + $0xb0] sm:$0xff]
          %v393 = vld [vmem:[%s292 + $0xb8] sm:$0xff]
          %v394 = vld [vmem:[%s292 + $0xc0] sm:$0xff]
          %v395 = vld [vmem:[%s292 + $0xc8] sm:$0xff]
          %v396 = vld [vmem:[%s292 + $0xd0] sm:$0xff]
          %v397 = vld [vmem:[%s292 + $0xd8] sm:$0xff]
          %v398 = vld [vmem:[%s292 + $0xe0] sm:$0xff]
          %v399 = vld [vmem:[%s292 + $0xe8] sm:$0xff]
          %v400 = vld [vmem:[%s292 + $0xf0] sm:$0xff]
          %v401 = vld [vmem:[%s292 + $0xf8] sm:$0xff]
          %402 = vmatprep.subr.mxu0 0.0
          %403 = vmatpush1.msra.mxu0 %v385
          %404 = vmatprep.subr.mxu0 0.0
          %405 = vmatpush1.msra.mxu0 %v384
          %406 = vmatprep.subr.mxu0 0.0
          %407 = vmatpush1.msra.mxu0 %v383
          %408 = vmatprep.subr.mxu0 0.0
          %409 = vmatpush1.msra.mxu0 %v382
          %410 = vmatprep.subr.mxu0 0.0
          %411 = vmatpush1.msra.mxu0 %v381
          %412 = vmatprep.subr.mxu0 0.0
          %413 = vmatpush1.msra.mxu0 %v380
          %414 = vmatprep.subr.mxu0 0.0
          %415 = vmatpush1.msra.mxu0 %v379
          %416 = vmatprep.subr.mxu0 0.0
          %417 = vmatpush1.msra.mxu0 %v378
          %418 = vmatprep.subr.mxu0 0.0
          %419 = vmatpush1.msra.mxu0 %v377
          %420 = vmatprep.subr.mxu0 0.0
          %421 = vmatpush1.msra.mxu0 %v376
          %422 = vmatprep.subr.mxu0 0.0
          %423 = vmatpush1.msra.mxu0 %v375
          %424 = vmatprep.subr.mxu0 0.0
          %425 = vmatpush1.msra.mxu0 %v374
          %426 = vmatprep.subr.mxu0 0.0
          %427 = vmatpush1.msra.mxu0 %v373
          %428 = vmatprep.subr.mxu0 0.0
          %429 = vmatpush1.msra.mxu0 %v372
          %430 = vmatprep.subr.mxu0 0.0
          %431 = vmatpush1.msra.mxu0 %v371
          %432 = vmatprep.subr.mxu0 0.0
          %433 = vmatpush1.msra.mxu0 %v370
          %434 = vmatprep.subr.mxu0 0.0
          %435 = vmatpush2.msra.mxu0 %v401
          %436 = vmatprep.subr.mxu0 0.0
          %437 = vmatpush2.msra.mxu0 %v400
          %438 = vmatprep.subr.mxu0 0.0
          %439 = vmatpush2.msra.mxu0 %v399
          %440 = vmatprep.subr.mxu0 0.0
          %441 = vmatpush2.msra.mxu0 %v398
          %442 = vmatprep.subr.mxu0 0.0
          %443 = vmatpush2.msra.mxu0 %v397
          %444 = vmatprep.subr.mxu0 0.0
          %445 = vmatpush2.msra.mxu0 %v396
          %446 = vmatprep.subr.mxu0 0.0
          %447 = vmatpush2.msra.mxu0 %v395
          %448 = vmatprep.subr.mxu0 0.0
          %449 = vmatpush2.msra.mxu0 %v394
          %450 = vmatprep.subr.mxu0 0.0
          %451 = vmatpush2.msra.mxu0 %v393
          %452 = vmatprep.subr.mxu0 0.0
          %453 = vmatpush2.msra.mxu0 %v392
          %454 = vmatprep.subr.mxu0 0.0
          %455 = vmatpush2.msra.mxu0 %v391
          %456 = vmatprep.subr.mxu0 0.0
          %457 = vmatpush2.msra.mxu0 %v390
          %458 = vmatprep.subr.mxu0 0.0
          %459 = vmatpush2.msra.mxu0 %v389
          %460 = vmatprep.subr.mxu0 0.0
          %461 = vmatpush2.msra.mxu0 %v388
          %462 = vmatprep.subr.mxu0 0.0
          %463 = vmatpush2.msra.mxu0 %v387
          %464 = vmatprep.subr.mxu0 0.0
          %465 = vmatpush2.msra.mxu0 %v386
          %466 = vmatprep.mubr.f32.mxu0 %v368
          %467 = vmatmul.mubr.f32.gmra.mxu0 %v367
          %v468 = vpop.f32.mrf.mxu0
          %v469 = vadd.f32 0.0, %v468
          %v470 = vpop.f32.mrf.mxu0
          %471 = vdwg.mxu0
          %v472 = vadd.f32 %v369, %v469
          %473 = vst [vmem:[#allocation2] sm:$0xff] %v472
        $region52: #{tpu_custom_call.1} parent=31 // pred_fallthru
          _
        %p474 = scmp.eq.s32.totalorder %s31, 1
        // Predicated region
        $region53: #{tpu_custom_call.1} parent=31 // pred_check
          %p475 = pneg %p474
        $region54: #{tpu_custom_call.1} parent=31 // pred_check_branch
          %477 = sbr.rel (%p475) target = $region56
        $region55: #{tpu_custom_call.1} parent=31 // pred_region
          %v478 = vld [vmem:[#allocation2] sm:$0xff]
          %v479 = vld [vmem:[%s301] sm:$0xff]
          %v480 = vld [vmem:[%s301 + $0x8] sm:$0xff]
          %v481 = vld [vmem:[%s301 + $0x10] sm:$0xff]
          %v482 = vld [vmem:[%s301 + $0x18] sm:$0xff]
          %v483 = vld [vmem:[%s301 + $0x20] sm:$0xff]
          %v484 = vld [vmem:[%s301 + $0x28] sm:$0xff]
          %v485 = vld [vmem:[%s301 + $0x30] sm:$0xff]
          %v486 = vld [vmem:[%s301 + $0x38] sm:$0xff]
          %v487 = vld [vmem:[%s301 + $0x40] sm:$0xff]
          %v488 = vld [vmem:[%s301 + $0x48] sm:$0xff]
          %v489 = vld [vmem:[%s301 + $0x50] sm:$0xff]
          %v490 = vld [vmem:[%s301 + $0x58] sm:$0xff]
          %v491 = vld [vmem:[%s301 + $0x60] sm:$0xff]
          %v492 = vld [vmem:[%s301 + $0x68] sm:$0xff]
          %v493 = vld [vmem:[%s301 + $0x70] sm:$0xff]
          %v494 = vld [vmem:[%s301 + $0x78] sm:$0xff]
          %v495 = vld [vmem:[%s301 + $0x80] sm:$0xff]
          %v496 = vld [vmem:[%s301 + $0x88] sm:$0xff]
          %v497 = vld [vmem:[%s301 + $0x90] sm:$0xff]
          %v498 = vld [vmem:[%s301 + $0x98] sm:$0xff]
          %v499 = vld [vmem:[%s301 + $0xa0] sm:$0xff]
          %v500 = vld [vmem:[%s301 + $0xa8] sm:$0xff]
          %v501 = vld [vmem:[%s301 + $0xb0] sm:$0xff]
          %v502 = vld [vmem:[%s301 + $0xb8] sm:$0xff]
          %v503 = vld [vmem:[%s301 + $0xc0] sm:$0xff]
          %v504 = vld [vmem:[%s301 + $0xc8] sm:$0xff]
          %v505 = vld [vmem:[%s301 + $0xd0] sm:$0xff]
          %v506 = vld [vmem:[%s301 + $0xd8] sm:$0xff]
          %v507 = vld [vmem:[%s301 + $0xe0] sm:$0xff]
          %v508 = vld [vmem:[%s301 + $0xe8] sm:$0xff]
          %v509 = vld [vmem:[%s301 + $0xf0] sm:$0xff]
          %v510 = vld [vmem:[%s301 + $0xf8] sm:$0xff]
          %511 = vmatprep.subr.mxu0 %v510
          %512 = vmatpush1.msra.mxu0 %v509
          %513 = vmatprep.subr.mxu0 %v508
          %514 = vmatpush1.msra.mxu0 %v507
          %515 = vmatprep.subr.mxu0 %v506
          %516 = vmatpush1.msra.mxu0 %v505
          %517 = vmatprep.subr.mxu0 %v504
          %518 = vmatpush1.msra.mxu0 %v503
          %519 = vmatprep.subr.mxu0 %v502
          %520 = vmatpush1.msra.mxu0 %v501
          %521 = vmatprep.subr.mxu0 %v500
          %522 = vmatpush1.msra.mxu0 %v499
          %523 = vmatprep.subr.mxu0 %v498
          %524 = vmatpush1.msra.mxu0 %v497
          %525 = vmatprep.subr.mxu0 %v496
          %526 = vmatpush1.msra.mxu0 %v495
          %527 = vmatprep.subr.mxu0 %v494
          %528 = vmatpush1.msra.mxu0 %v493
          %529 = vmatprep.subr.mxu0 %v492
          %530 = vmatpush1.msra.mxu0 %v491
          %531 = vmatprep.subr.mxu0 %v490
          %532 = vmatpush1.msra.mxu0 %v489
          %533 = vmatprep.subr.mxu0 %v488
          %534 = vmatpush1.msra.mxu0 %v487
          %535 = vmatprep.subr.mxu0 %v486
          %536 = vmatpush1.msra.mxu0 %v485
          %537 = vmatprep.subr.mxu0 %v484
          %538 = vmatpush1.msra.mxu0 %v483
          %539 = vmatprep.subr.mxu0 %v482
          %540 = vmatpush1.msra.mxu0 %v481
          %541 = vmatprep.subr.mxu0 %v480
          %542 = vmatpush1.msra.mxu0 %v479
          %543 = vmatprep.subr.mxu0 0.0
          %544 = vmatpush2.msra.mxu0 0.0
          %545 = vmatprep.subr.mxu0 0.0
          %546 = vmatpush2.msra.mxu0 0.0
          %547 = vmatprep.subr.mxu0 0.0
          %548 = vmatpush2.msra.mxu0 0.0
          %549 = vmatprep.subr.mxu0 0.0
          %550 = vmatpush2.msra.mxu0 0.0
          %551 = vmatprep.subr.mxu0 0.0
          %552 = vmatpush2.msra.mxu0 0.0
          %553 = vmatprep.subr.mxu0 0.0
          %554 = vmatpush2.msra.mxu0 0.0
          %555 = vmatprep.subr.mxu0 0.0
          %556 = vmatpush2.msra.mxu0 0.0
          %557 = vmatprep.subr.mxu0 0.0
          %558 = vmatpush2.msra.mxu0 0.0
          %559 = vmatprep.subr.mxu0 0.0
          %560 = vmatpush2.msra.mxu0 0.0
          %561 = vmatprep.subr.mxu0 0.0
          %562 = vmatpush2.msra.mxu0 0.0
          %563 = vmatprep.subr.mxu0 0.0
          %564 = vmatpush2.msra.mxu0 0.0
          %565 = vmatprep.subr.mxu0 0.0
          %566 = vmatpush2.msra.mxu0 0.0
          %567 = vmatprep.subr.mxu0 0.0
          %568 = vmatpush2.msra.mxu0 0.0
          %569 = vmatprep.subr.mxu0 0.0
          %570 = vmatpush2.msra.mxu0 0.0
          %571 = vmatprep.subr.mxu0 0.0
          %572 = vmatpush2.msra.mxu0 0.0
          %573 = vmatprep.subr.mxu0 0.0
          %574 = vmatpush2.msra.mxu0 0.0
          %575 = vmatprep.mubr.f32.mxu0 0.0
          %576 = vmatmul.mubr.f32.gmra.mxu0 %v478
          %v577 = vpop.f32.mrf.mxu0
          %v578 = vadd.f32 0.0, %v577
          %v579 = vpop.f32.mrf.mxu0
          %v580 = vadd.f32 0.0, %v579
          %581 = vdwg.mxu0
          %v582 = vld [vmem:[#allocation3] sm:$0xff]
          %v583 = vmax.f32 %v578, %v580
          %584 = vmax.xlane.f32.xlu0 %v583
          %v585 = vpop.xlane.xlu0 %584
          %v586 = vmax.f32 %v582, %v585
          %v587 = vsub.f32 %v582, %v586
          %v588 = vmul.f32 %v587, 1.442695
          %v589 = vpow.pop %v588
          %591 = vset.pattern.permute.xlu0 0
          %592 = vperm.xlu0 %591, %v586
          %v593 = vpop.permute.xlu0 %592
          %v595 = vsub.f32 %v578, %v593
          %v596 = vsub.f32 %v580, %v593
          %v597 = vmul.f32 %v595, 1.442695
          %v598 = vpow.pop %v597
          %v599 = vmul.f32 %v596, 1.442695
          %v600 = vpow.pop %v599
          %v601 = vld [vmem:[#allocation4] sm:$0xff]
          %v602 = vmul.f32 %v589, %v601
          %v603 = vadd.f32 %v598, %v600
          %604 = vadd.xlane.f32.xlu0 %v603
          %v605 = vpop.xlane.xlu0 %604
          %v606 = vadd.f32 %v602, %v605
          %vm607 = vcmask 7168
          %608 = vst.msk [vmem:[#allocation3] sm:$0xff] %vm607, %v586
          %609 = vst.msk [vmem:[#allocation4] sm:$0xff] %vm607, %v606
          %v610 = vlog2.pop %v606
          %v611 = vmul.f32 %v610, 0.6931472
          %v612 = vadd.f32 %v586, %v611
          %614 = vset.pattern.permute.xlu0 0
          %615 = vperm.xlu0 %614, %v612
          %v616 = vpop.permute.xlu0 %615
          %v618 = vsub.f32 %v578, %v616
          %v619 = vsub.f32 %v580, %v616
          %620 = vst [vmem:[%s333] sm:$0xff] %v618
          %621 = vst [vmem:[%s333 + $0x8] sm:$0xff] %v619
          // Predicated region
          $region57: #{tpu_custom_call.1} parent=55 // pred_check
            %p622 = pneg %p355
          $region58: #{tpu_custom_call.1} parent=55 // pred_check_branch
            %624 = sbr.rel (%p622) target = $region60
          $region59: #{tpu_custom_call.1} parent=55 // pred_region
            %v625 = vld [vmem:[#allocation3] sm:$0xff]
            %v626 = vld [vmem:[#allocation4] sm:$0xff]
            %v627 = vlog2.pop %v626
            %v628 = vmul.f32 %v627, 0.6931472
            %v629 = vadd.f32 %v625, %v628
            %630 = vst.msk [vmem:[%s353] sm:$0xff] %vm607, %v629
          $region60: #{tpu_custom_call.1} parent=55 // pred_fallthru
            _
        $region56: #{tpu_custom_call.1} parent=31 // pred_fallthru
          _
        %s631 = sand.u32 %s146, 1
        %s632 = scalar_lea.sflag [#allocation7], %s631
        %s633 = sand.u32 %s146, 1
        %s634 = smul.addr %s633, 16
        %s635 = scalar_lea.vmem [#allocation11], %s634
        %p636 = scmp.lt.s32.totalorder %s30, 0
        %s637 = scalar_select %p636, %s30, 0
        %s638 = smul.addr %s637, 8
        %s639 = scalar_lea.vmem %s4, %s638
        // Predicated region
        $region61: #{tpu_custom_call.1} parent=31 // pred_check
          %p640 = pneg %p156
        $region62: #{tpu_custom_call.1} parent=31 // pred_check_branch
          %642 = sbr.rel (%p640) target = $region64
        $region63: #{tpu_custom_call.1} parent=31 // pred_region
          %s643 = smul.u32 %s32, %s31
          %s644 = smul.u32 2, %s643
          %s646 = ssub.s32 256, 256
          %647 = vsyncadd %s632, %s646
          %s648 = smul.addr %s30, 2
          %s649 = sadd.s32 %s644, %s648
          %s650 = smul.addr %s649, 128
          %s651 = scalar_lea.hbm %s3, %s650
          %s653 = sshll.u32 %s635, 4
          %s654 = int_to_ptr.vmem [resolvable:$true] %s653
          %656 = dma.vmem_to_hbm [thread:$0]  %s654, 256, %s651, %s632
        $region64: #{tpu_custom_call.1} parent=31 // pred_fallthru
          _
        // Predicated region
        $region65: #{tpu_custom_call.1} parent=31 // pred_check
          %p657 = pneg %p182
        $region66: #{tpu_custom_call.1} parent=31 // pred_check_branch
          %659 = sbr.rel (%p657) target = $region68
        $region67: #{tpu_custom_call.1} parent=31 // pred_region
          _
        $region68: #{tpu_custom_call.1} parent=31 // pred_fallthru
          _
        // Predicated region
        $region69: #{tpu_custom_call.1} parent=31 // pred_check
          %p660 = pneg %p182
        $region70: #{tpu_custom_call.1} parent=31 // pred_check_branch
          %662 = sbr.rel (%p660) target = $region72
        $region71: #{tpu_custom_call.1} parent=31 // pred_region
          %p663 = scmp.lt.s32.totalorder %s30, 0
          %s664 = scalar_select %p663, %s30, 0
          %s665 = smul.addr %s664, 8
          %s666 = scalar_lea.vmem %s4, %s665
        $region72: #{tpu_custom_call.1} parent=31 // pred_fallthru
          _
      $region32: #{tpu_custom_call.1} parent=5 // pred_fallthru
        _
      %p667 = scmp.le.s32.totalorder 2, %s20
      // Predicated region
      $region73: #{tpu_custom_call.1} parent=5 // pred_check
        %p668 = pneg %p667
      $region74: #{tpu_custom_call.1} parent=5 // pred_check_branch
        %670 = sbr.rel (%p668) target = $region76
      $region75: #{tpu_custom_call.1} parent=5 // pred_region
        %s671 = ssub.s32 %s20, 2
        // Predicated region
        $region77: #{tpu_custom_call.1} parent=75 // pred_check
          %p672 = pneg %p162
        $region78: #{tpu_custom_call.1} parent=75 // pred_check_branch
          %674 = sbr.rel (%p672) target = $region80
        $region79: #{tpu_custom_call.1} parent=75 // pred_region
          %s675 = sand.u32 %s147, 1
          %s676 = scalar_lea.sflag [#allocation7], %s675
          %s677 = sand.u32 %s147, 1
          %s678 = smul.addr %s677, 16
          %s679 = scalar_lea.vmem [#allocation11], %s678
          %680 = dma.done %s676, 256
        $region80: #{tpu_custom_call.1} parent=75 // pred_fallthru
          _
      $region76: #{tpu_custom_call.1} parent=5 // pred_fallthru
        _
    $region6: #{tpu_custom_call.1} parent=1 // loop_footer
      %s24 = sadd.s32 1, %s20
    $region7: #{tpu_custom_call.1} parent=1 // loop_footer_branch
      %19 = sbr.rel target = $region3
    $region8: #{tpu_custom_call.1} parent=1 // loop_exit
      _
    %681 = vsyncpa [#allocation6], 1
    %s682 = scalar_lea.sflag [#allocation6], 1
    %683 = vsyncpa %s682, 1
    %684 = vsyncpa [#allocation9], 1
    %s685 = scalar_lea.sflag [#allocation9], 1
    %686 = vsyncpa %s685, 1
    %687 = vsyncpa [#allocation7], 1
    %s688 = scalar_lea.sflag [#allocation7], 1
    %689 = vsyncpa %s688, 1

</llo_original>
